<compile_context>
chip_gen: v5e
topology: v5e:2x2
jax: 0.10.0
libtpu: 0.0.40
codegen_flags: <defaults>
</compile_context>

<pallas_src>
import jax
import jax.numpy as jnp
from jax import lax
from jax.experimental import pallas as pl
from jax.experimental.pallas import tpu as pltpu

NEG_SLOPE = 0.1
ACT_DTYPE = jnp.bfloat16          # activations / weights; MXU accumulates in f32


def _ceil8(c):
    return ((c + 7) // 8) * 8


def _mosaic_params(n_grid_axes, est_bytes):
    # Cap below the smallest physical VMEM (v7x: 64 MiB) with headroom for
    # Mosaic internal scratch; blocks here are sized well under this anyway.
    vlim = int(min(max(est_bytes, 16 << 20), 48 << 20))
    return pltpu.CompilerParams(
        dimension_semantics=("parallel",) * n_grid_axes,
        vmem_limit_bytes=vlim)


# ----------------------------------------------------------------------------
# Blind 3x3 conv kernel (shift_down + ReplicationPad2d(1) + conv + LeakyReLU +
# crop), optionally over several channel groups (split-weight accumulation).
# ----------------------------------------------------------------------------
def make_blind_conv_kernel(H, W, Wp, cins, Cout, IB):
    """refs: x_0..x_{n-1} (IB, L, Cin_i) flattened padded images,
             w_0..w_{n-1} (9, Cin_i, Cout)  taps (dy-major),
             o           (IB, H, W, Cout)."""
    M = H * Wp                     # flattened output rows (incl. 2 garbage cols)
    n = len(cins)

    def kernel(*refs):
        x_refs, w_refs, o_ref = refs[:n], refs[n:2 * n], refs[2 * n]
        for b in range(IB):
            acc = None
            for i in range(n):
                for t in range(9):
                    dy, dx = divmod(t, 3)
                    # shifted view of the flattened padded image -> tap (M, Cin_i)
                    tap = x_refs[i][b, pl.ds(dy * Wp + dx, M), :]
                    d = jnp.dot(tap, w_refs[i][t],
                                preferred_element_type=jnp.float32)
                    acc = d if acc is None else acc + d
            acc = jnp.where(acc >= 0, acc, NEG_SLOPE * acc)          # LeakyReLU(0.1)
            # drop the 2 wrap-around garbage columns in VMEM (no HBM crop pass)
            out = acc.reshape(H, Wp, Cout)[:, :W, :]
            o_ref[b] = out.astype(o_ref.dtype)

    return kernel


def _pick_images_per_block(B, per_image_bytes, n_inputs):
    """Fold several whole images per grid step when they are small, but keep
    >= 2 grid steps (v7x megacore) and bounded unroll / VMEM."""
    max_unroll = max(1, 36 // (9 * n_inputs))     # <= ~36 unrolled dots per step
    budget = 4 << 20
    ib = 1
    for cand in range(1, B + 1):
        if B % cand:
            continue
        if cand > max_unroll or cand * per_image_bytes > budget:
            continue
        if B // cand < 2:
            continue
        ib = cand
    return ib


def blind_conv_multi(xs, ws):
    """Blind_Conv over channel-grouped inputs:
       conv(concat(xs, -1), concat(ws)) == sum_i conv(xs[i], ws[i])."""
    B, H, W, _ = xs[0].shape
    Cout = int(ws[0].shape[-1])
    Wp = W + 2
    L = (H + 3) * Wp
    cins = tuple(int(x.shape[-1]) for x in xs)

    flats = []
    for x in xs:
        # Replicate-pad columns, then 2 zero rows on top (+1 unused bottom row)
        # == shift_down + ReplicationPad2d(1) as seen by the kept output rows.
        xe = jnp.pad(x, ((0, 0), (0, 0), (1, 1), (0, 0)), mode="edge")
        xp = jnp.pad(xe, ((0, 0), (2, 1), (0, 0), (0, 0)))
        flats.append(xp.reshape(B, L, x.shape[-1]))      # contiguous, free reshape

    per_img = sum(L * c * 2 for c in cins) + H * W * Cout * 2
    IB = _pick_images_per_block(B, per_img, len(xs))
    grid = (B // IB,)

    in_specs = [pl.BlockSpec((IB, L, c), lambda g: (g, 0, 0)) for c in cins]
    in_specs += [pl.BlockSpec(tuple(w.shape), lambda g: (0, 0, 0)) for w in ws]
    out_specs = pl.BlockSpec((IB, H, W, Cout), lambda g: (g, 0, 0, 0))

    M = H * Wp
    est = (2 * IB * per_img + 2 * sum(int(w.size) * 2 for w in ws)
           + IB * M * Cout * 4 + M * max(cins) * 2 + (8 << 20))

    out = pl.pallas_call(
        make_blind_conv_kernel(H, W, Wp, cins, Cout, IB),
        out_shape=jax.ShapeDtypeStruct((B, H, W, Cout), ACT_DTYPE),
        grid=grid,
        in_specs=in_specs,
        out_specs=out_specs,
        compiler_params=_mosaic_params(1, est),
    )(*flats, *ws)
    return out


# ----------------------------------------------------------------------------
# Fused nin_A -> nin_B -> nin_C 1x1 conv chain
# ----------------------------------------------------------------------------
def nin_fused_kernel(x_ref, wa_ref, wb_ref, wc_ref, o_ref):
    a = jnp.dot(x_ref[...], wa_ref[...], preferred_element_type=jnp.float32)
    a = jnp.where(a >= 0, a, NEG_SLOPE * a).astype(ACT_DTYPE)
    b = jnp.dot(a, wb_ref[...], preferred_element_type=jnp.float32)
    b = jnp.where(b >= 0, b, NEG_SLOPE * b).astype(ACT_DTYPE)
    o_ref[...] = jnp.dot(b, wc_ref[...], preferred_element_type=jnp.float32)


def _pick_pixel_tile(M, target=4096):
    limit = min(target, max(M // 2, 8))
    best = M
    for cand in range(8, limit + 1, 8):
        if M % cand == 0:
            best = cand
    if best > limit:
        best = M
    return best


def nin_chain(x, wa, wb, wc):
    N, H, W, C = x.shape
    n_out = int(wc.shape[-1])
    M = N * H * W
    TM = _pick_pixel_tile(M)
    xf = x.reshape(M, C)
    est = (2 * TM * C * 2 + 2 * int(wa.size + wb.size + wc.size) * 2
           + 2 * TM * n_out * 4 + TM * int(wa.shape[1]) * 6
           + TM * int(wb.shape[1]) * 6 + (8 << 20))
    out = pl.pallas_call(
        nin_fused_kernel,
        out_shape=jax.ShapeDtypeStruct((M, n_out), jnp.float32),
        grid=(M // TM,),
        in_specs=[pl.BlockSpec((TM, C), lambda m: (m, 0)),
                  pl.BlockSpec(tuple(wa.shape), lambda m: (0, 0)),
                  pl.BlockSpec(tuple(wb.shape), lambda m: (0, 0)),
                  pl.BlockSpec(tuple(wc.shape), lambda m: (0, 0))],
        out_specs=pl.BlockSpec((TM, n_out), lambda m: (m, 0)),
        compiler_params=_mosaic_params(1, est),
    )(xf, wa, wb, wc)
    return out.reshape(N, H, W, n_out)


# ----------------------------------------------------------------------------
# Plain-JAX glue (cheap data movement; no compute)
# ----------------------------------------------------------------------------
def blind_pool(x):          # Blind_Pool: shift-down, crop, MaxPool2d(2)
    B, H, W, C = x.shape
    z = jnp.concatenate([jnp.zeros((B, 1, W, C), x.dtype), x[:, : H - 1]], axis=1)
    z = z.reshape(B, H // 2, 2, W // 2, 2, C)
    return z.max(axis=(2, 4))


def shift_down_crop(x):     # shift module
    B, H, W, C = x.shape
    return jnp.concatenate([jnp.zeros((B, 1, W, C), x.dtype), x[:, : H - 1]], axis=1)


def upsample2(x):           # nearest, scale_factor=2
    return jnp.repeat(jnp.repeat(x, 2, axis=1), 2, axis=2)


def rotate(x):              # NHWC equivalents of the NCHW transpose/flip combos
    x90 = jnp.flip(jnp.swapaxes(x, 1, 2), axis=2)
    x180 = jnp.flip(jnp.flip(x, axis=1), axis=2)
    x270 = jnp.flip(jnp.swapaxes(x, 1, 2), axis=1)
    return jnp.concatenate([x, x90, x180, x270], axis=0)


def unrotate(x):
    x0, x90, x180, x270 = jnp.split(x, 4, axis=0)
    x90 = jnp.flip(jnp.swapaxes(x90, 1, 2), axis=1)
    x180 = jnp.flip(jnp.flip(x180, axis=1), axis=2)
    x270 = jnp.flip(jnp.swapaxes(x270, 1, 2), axis=2)
    return jnp.concatenate([x0, x90, x180, x270], axis=3)


def dec_conv(x, x_in, w1_slabs, w2_slabs):
    # TODO(synk): fold the nearest 2x upsample into the blind-conv DMA/index-map.
    x = upsample2(x)
    dY = x_in.shape[1] - x.shape[1]
    dX = x_in.shape[2] - x.shape[2]
    if dY or dX:
        x = jnp.pad(x, ((0, 0), (dY // 2, dY - dY // 2),
                        (dX // 2, dX - dX // 2), (0, 0)))
    # conv(concat(x, x_in)) via split-weight accumulation: concat never hits HBM.
    x = blind_conv_multi([x, x_in], w1_slabs)
    x = blind_conv_multi([x], w2_slabs)
    return x


# ----------------------------------------------------------------------------
# Network
# ----------------------------------------------------------------------------
def blind_unet(x, p):
    inp = x
    x = blind_conv_multi([x], p["enc0"])
    x1 = blind_pool(blind_conv_multi([x], p["enc1"]))
    x2 = blind_pool(blind_conv_multi([x1], p["enc2"]))
    x3 = blind_pool(blind_conv_multi([x2], p["enc3"]))
    x4 = blind_pool(blind_conv_multi([x3], p["enc4"]))
    x = blind_pool(blind_conv_multi([x4], p["enc5"]))
    x = blind_conv_multi([x], p["enc6"])
    x = dec_conv(x, x4, p["dec5_1"], p["dec5_2"])
    x = dec_conv(x, x3, p["dec4_1"], p["dec4_2"])
    x = dec_conv(x, x2, p["dec3_1"], p["dec3_2"])
    x = dec_conv(x, x1, p["dec2_1"], p["dec2_2"])
    x = dec_conv(x, inp, p["dec1_1"], p["dec1_2"])
    x = shift_down_crop(x)
    return x


def blind_spot_net(x_nchw, params):
    x = jnp.transpose(x_nchw, (0, 2, 3, 1)).astype(ACT_DTYPE)   # NCHW -> NHWC, bf16
    _, H, W, C = x.shape
    if H > W:
        d = H - W
        x = jnp.pad(x, ((0, 0), (0, 0), (d // 2, d - d // 2), (0, 0)), mode="reflect")
    elif W > H:
        d = W - H
        x = jnp.pad(x, ((0, 0), (d // 2, d - d // 2), (0, 0), (0, 0)), mode="reflect")
    x = rotate(x)
    Cp = _ceil8(C)
    if Cp != C:                                  # tiny zero channel pad (enc0 / dec1 skip)
        x = jnp.pad(x, ((0, 0), (0, 0), (0, 0), (0, Cp - C)))
    x = blind_unet(x, params)
    x = unrotate(x)                              # (N, H, W, 384)
    x = nin_chain(x, params["nin_A"], params["nin_B"], params["nin_C"])
    return jnp.transpose(x, (0, 3, 1, 2))        # NCHW, f32


# ----------------------------------------------------------------------------
# Parameters (synthetic, bias=False everywhere) + one-time weight prep
# ----------------------------------------------------------------------------
def _conv_w(key, cin, cout):   # HWIO, cross-correlation like PyTorch Conv2d
    return (1.0 / jnp.sqrt(9.0 * cin)) * jax.random.normal(
        key, (3, 3, cin, cout), jnp.float32)


def _nin_w(key, cin, cout):
    return (1.0 / jnp.sqrt(float(cin))) * jax.random.normal(
        key, (cin, cout), jnp.float32)


def init_params(key, n_channels=3, n_output=9):
    specs = [
        ("enc0", n_channels, 48), ("enc1", 48, 48), ("enc2", 48, 48),
        ("enc3", 48, 48), ("enc4", 48, 48), ("enc5", 48, 48), ("enc6", 48, 48),
        ("dec5_1", 96, 96), ("dec5_2", 96, 96),
        ("dec4_1", 144, 96), ("dec4_2", 96, 96),
        ("dec3_1", 144, 96), ("dec3_2", 96, 96),
        ("dec2_1", 144, 96), ("dec2_2", 96, 96),
        ("dec1_1", 96 + n_channels, 96), ("dec1_2", 96, 96),
    ]
    keys = jax.random.split(key, len(specs) + 3)
    params = {name: _conv_w(k, cin, cout)
              for k, (name, cin, cout) in zip(keys[: len(specs)], specs)}
    params["nin_A"] = _nin_w(keys[-3], 384, 384)
    params["nin_B"] = _nin_w(keys[-2], 384, 96)
    params["nin_C"] = _nin_w(keys[-1], 96, n_output)
    return params


def _prep_conv_w(w):           # (3,3,Cin,Cout) f32 -> (9, Cin, Cout) bf16 (dy-major)
    return w.reshape(9, w.shape[2], w.shape[3]).astype(ACT_DTYPE)


def _pad_cin(w, cin_to):
    pc = cin_to - w.shape[2]
    return jnp.pad(w, ((0, 0), (0, 0), (0, pc), (0, 0))) if pc else w


def prepare_params(params, n_channels=3):
    """One-time prep: tap-major reshape, bf16 cast, channel padding and decoder
    split-weight slabs (hoisted out of the traced graph)."""
    Cp = _ceil8(n_channels)
    p = {"enc0": [_prep_conv_w(_pad_cin(params["enc0"], Cp))]}
    for name in ("enc1", "enc2", "enc3", "enc4", "enc5", "enc6",
                 "dec5_2", "dec4_2", "dec3_2", "dec2_2", "dec1_2"):
        p[name] = [_prep_conv_w(params[name])]
    # decoder first convs: split along input channels (upsampled part | skip part)
    for name, c_up in (("dec5_1", 48), ("dec4_1", 96), ("dec3_1", 96),
                       ("dec2_1", 96), ("dec1_1", 96)):
        w = params[name]
        wa, wb = w[:, :, :c_up, :], w[:, :, c_up:, :]
        if name == "dec1_1":
            wb = _pad_cin(wb, Cp)
        p[name] = [_prep_conv_w(wa), _prep_conv_w(wb)]
    p["nin_A"] = params["nin_A"].astype(ACT_DTYPE)
    p["nin_B"] = params["nin_B"].astype(ACT_DTYPE)
    p["nin_C"] = params["nin_C"].astype(ACT_DTYPE)
    return p


# ----------------------------------------------------------------------------
# Numerical self-check of the blind-conv kernel vs a plain-JAX reference that
# mirrors PyTorch Blind_Conv op-by-op (shift_down, ReplicationPad2d, conv,
# LeakyReLU, crop).
# ----------------------------------------------------------------------------
def _ref_blind_conv(x_nhwc, w_hwio):
    x = x_nhwc.astype(jnp.float32)
    x = jnp.pad(x, ((0, 0), (1, 0), (0, 0), (0, 0)))                  # shift_down
    x = jnp.pad(x, ((0, 0), (1, 1), (1, 1), (0, 0)), mode="edge")     # ReplicationPad2d(1)
    w = w_hwio.astype(ACT_DTYPE).astype(jnp.float32)                  # match bf16 weights
    y = lax.conv_general_dilated(x, w, window_strides=(1, 1), padding="VALID",
                                 dimension_numbers=("NHWC", "HWIO", "NHWC"))
    y = jnp.where(y >= 0, y, NEG_SLOPE * y)
    return y[:, :-1, :, :]                                            # crop last row


def _self_check_blind_conv():
    k = jax.random.PRNGKey(1)
    k1, k2, k3, k4 = jax.random.split(k, 4)
    a = jax.random.normal(k1, (2, 8, 8, 16), jnp.float32).astype(ACT_DTYPE)
    b = jax.random.normal(k2, (2, 8, 8, 8), jnp.float32).astype(ACT_DTYPE)
    wa = _conv_w(k3, 16, 48)
    wb = _conv_w(k4, 8, 48)
    out = blind_conv_multi([a, b], [_prep_conv_w(wa), _prep_conv_w(wb)])
    ref = _ref_blind_conv(jnp.concatenate([a, b], axis=-1),
                          jnp.concatenate([wa, wb], axis=2))
    err = float(jnp.max(jnp.abs(out.astype(jnp.float32) - ref)))
    assert err < 0.05, f"blind_conv self-check failed, max err {err}"


# ----------------------------------------------------------------------------
if __name__ == "__main__":
    _self_check_blind_conv()

    key = jax.random.PRNGKey(0)
    kx, kp = jax.random.split(key)

    N, C, H, W = 2, 3, 32, 32          # 5 pooling levels -> spatial must be /32
    n_output = 9
    x = jax.random.normal(kx, (N, C, H, W), jnp.float32)
    raw = init_params(kp, n_channels=C, n_output=n_output)
    prepped = prepare_params(raw, n_channels=C)

    fwd = jax.jit(lambda inp: blind_spot_net(inp, prepped))
    y = fwd(x)
    jax.block_until_ready(y)

    assert y.shape == (N, n_output, H, W), y.shape
    assert jnp.all(jnp.isfinite(y))
    print("KERNEL_OK")
</pallas_src>

<mosaic_0001>
module attributes {stable_mosaic.version = 11 : i64} {
  func.func @kernel(%arg0: i32, %arg1: memref<1x110x16xbf16, #tpu.memory_space<vmem>>, %arg2: memref<1x110x8xbf16, #tpu.memory_space<vmem>>, %arg3: memref<9x16x48xbf16, #tpu.memory_space<vmem>>, %arg4: memref<9x8x48xbf16, #tpu.memory_space<vmem>>, %arg5: memref<1x8x8x48xbf16, #tpu.memory_space<vmem>>) attributes {dimension_semantics = [#tpu.dimension_semantics<parallel>], iteration_bounds = array<i64: 2>, scalar_prefetch = 0 : i64, scratch_operands = 0 : i64, tpu.core_type = #tpu.core_type<tc>, window_params = [{transform_indices = @transform_0, window_bounds = array<i64: 1, 110, 16>}, {transform_indices = @transform_1, window_bounds = array<i64: 1, 110, 8>}, {pipeline_mode = #tpu.pipeline_mode<synchronous>, transform_indices = @transform_2, window_bounds = array<i64: 9, 16, 48>}, {pipeline_mode = #tpu.pipeline_mode<synchronous>, transform_indices = @transform_3, window_bounds = array<i64: 9, 8, 48>}, {transform_indices = @transform_4, window_bounds = array<i64: 1, 8, 8, 48>}]} {
    %c0 = arith.constant 0 : index
    %c0_0 = arith.constant 0 : index
    %c0_1 = arith.constant 0 : index
    %0 = vector.load %arg1[%c0, %c0_0, %c0_1] : memref<1x110x16xbf16, #tpu.memory_space<vmem>>, vector<1x80x16xbf16>
    %1 = vector.shape_cast %0 : vector<1x80x16xbf16> to vector<80x16xbf16>
    %c0_2 = arith.constant 0 : index
    %c0_3 = arith.constant 0 : index
    %c0_4 = arith.constant 0 : index
    %2 = vector.load %arg3[%c0_2, %c0_3, %c0_4] : memref<9x16x48xbf16, #tpu.memory_space<vmem>>, vector<1x16x48xbf16>
    %3 = vector.shape_cast %2 : vector<1x16x48xbf16> to vector<16x48xbf16>
    %cst = arith.constant dense<0.000000e+00> : vector<80x48xf32>
    %4 = tpu.matmul %1, %3, %cst {dimension_numbers = #tpu.dot_dimension_numbers<[1], [0], [0], [1], [0, 0, 1, 1], [], []>} : vector<80x16xbf16>, vector<16x48xbf16>, vector<80x48xf32> -> vector<80x48xf32>
    %c0_5 = arith.constant 0 : index
    %c1 = arith.constant 1 : index
    %c0_6 = arith.constant 0 : index
    %5 = vector.load %arg1[%c0_5, %c1, %c0_6] : memref<1x110x16xbf16, #tpu.memory_space<vmem>>, vector<1x80x16xbf16>
    %6 = vector.shape_cast %5 : vector<1x80x16xbf16> to vector<80x16xbf16>
    %c1_7 = arith.constant 1 : index
    %c0_8 = arith.constant 0 : index
    %c0_9 = arith.constant 0 : index
    %7 = vector.load %arg3[%c1_7, %c0_8, %c0_9] : memref<9x16x48xbf16, #tpu.memory_space<vmem>>, vector<1x16x48xbf16>
    %8 = vector.shape_cast %7 : vector<1x16x48xbf16> to vector<16x48xbf16>
    %cst_10 = arith.constant dense<0.000000e+00> : vector<80x48xf32>
    %9 = tpu.matmul %6, %8, %cst_10 {dimension_numbers = #tpu.dot_dimension_numbers<[1], [0], [0], [1], [0, 0, 1, 1], [], []>} : vector<80x16xbf16>, vector<16x48xbf16>, vector<80x48xf32> -> vector<80x48xf32>
    %10 = arith.addf %4, %9 : vector<80x48xf32>
    %c0_11 = arith.constant 0 : index
    %c2 = arith.constant 2 : index
    %c0_12 = arith.constant 0 : index
    %11 = vector.load %arg1[%c0_11, %c2, %c0_12] : memref<1x110x16xbf16, #tpu.memory_space<vmem>>, vector<1x80x16xbf16>
    %12 = vector.shape_cast %11 : vector<1x80x16xbf16> to vector<80x16xbf16>
    %c2_13 = arith.constant 2 : index
    %c0_14 = arith.constant 0 : index
    %c0_15 = arith.constant 0 : index
    %13 = vector.load %arg3[%c2_13, %c0_14, %c0_15] : memref<9x16x48xbf16, #tpu.memory_space<vmem>>, vector<1x16x48xbf16>
    %14 = vector.shape_cast %13 : vector<1x16x48xbf16> to vector<16x48xbf16>
    %cst_16 = arith.constant dense<0.000000e+00> : vector<80x48xf32>
    %15 = tpu.matmul %12, %14, %cst_16 {dimension_numbers = #tpu.dot_dimension_numbers<[1], [0], [0], [1], [0, 0, 1, 1], [], []>} : vector<80x16xbf16>, vector<16x48xbf16>, vector<80x48xf32> -> vector<80x48xf32>
    %16 = arith.addf %10, %15 : vector<80x48xf32>
    %c0_17 = arith.constant 0 : index
    %c10 = arith.constant 10 : index
    %c0_18 = arith.constant 0 : index
    %17 = vector.load %arg1[%c0_17, %c10, %c0_18] : memref<1x110x16xbf16, #tpu.memory_space<vmem>>, vector<1x80x16xbf16>
    %18 = vector.shape_cast %17 : vector<1x80x16xbf16> to vector<80x16xbf16>
    %c3 = arith.constant 3 : index
    %c0_19 = arith.constant 0 : index
    %c0_20 = arith.constant 0 : index
    %19 = vector.load %arg3[%c3, %c0_19, %c0_20] : memref<9x16x48xbf16, #tpu.memory_space<vmem>>, vector<1x16x48xbf16>
    %20 = vector.shape_cast %19 : vector<1x16x48xbf16> to vector<16x48xbf16>
    %cst_21 = arith.constant dense<0.000000e+00> : vector<80x48xf32>
    %21 = tpu.matmul %18, %20, %cst_21 {dimension_numbers = #tpu.dot_dimension_numbers<[1], [0], [0], [1], [0, 0, 1, 1], [], []>} : vector<80x16xbf16>, vector<16x48xbf16>, vector<80x48xf32> -> vector<80x48xf32>
    %22 = arith.addf %16, %21 : vector<80x48xf32>
    %c0_22 = arith.constant 0 : index
    %c11 = arith.constant 11 : index
    %c0_23 = arith.constant 0 : index
    %23 = vector.load %arg1[%c0_22, %c11, %c0_23] : memref<1x110x16xbf16, #tpu.memory_space<vmem>>, vector<1x80x16xbf16>
    %24 = vector.shape_cast %23 : vector<1x80x16xbf16> to vector<80x16xbf16>
    %c4 = arith.constant 4 : index
    %c0_24 = arith.constant 0 : index
    %c0_25 = arith.constant 0 : index
    %25 = vector.load %arg3[%c4, %c0_24, %c0_25] : memref<9x16x48xbf16, #tpu.memory_space<vmem>>, vector<1x16x48xbf16>
    %26 = vector.shape_cast %25 : vector<1x16x48xbf16> to vector<16x48xbf16>
    %cst_26 = arith.constant dense<0.000000e+00> : vector<80x48xf32>
    %27 = tpu.matmul %24, %26, %cst_26 {dimension_numbers = #tpu.dot_dimension_numbers<[1], [0], [0], [1], [0, 0, 1, 1], [], []>} : vector<80x16xbf16>, vector<16x48xbf16>, vector<80x48xf32> -> vector<80x48xf32>
    %28 = arith.addf %22, %27 : vector<80x48xf32>
    %c0_27 = arith.constant 0 : index
    %c12 = arith.constant 12 : index
    %c0_28 = arith.constant 0 : index
    %29 = vector.load %arg1[%c0_27, %c12, %c0_28] : memref<1x110x16xbf16, #tpu.memory_space<vmem>>, vector<1x80x16xbf16>
    %30 = vector.shape_cast %29 : vector<1x80x16xbf16> to vector<80x16xbf16>
    %c5 = arith.constant 5 : index
    %c0_29 = arith.constant 0 : index
    %c0_30 = arith.constant 0 : index
    %31 = vector.load %arg3[%c5, %c0_29, %c0_30] : memref<9x16x48xbf16, #tpu.memory_space<vmem>>, vector<1x16x48xbf16>
    %32 = vector.shape_cast %31 : vector<1x16x48xbf16> to vector<16x48xbf16>
    %cst_31 = arith.constant dense<0.000000e+00> : vector<80x48xf32>
    %33 = tpu.matmul %30, %32, %cst_31 {dimension_numbers = #tpu.dot_dimension_numbers<[1], [0], [0], [1], [0, 0, 1, 1], [], []>} : vector<80x16xbf16>, vector<16x48xbf16>, vector<80x48xf32> -> vector<80x48xf32>
    %34 = arith.addf %28, %33 : vector<80x48xf32>
    %c0_32 = arith.constant 0 : index
    %c20 = arith.constant 20 : index
    %c0_33 = arith.constant 0 : index
    %35 = vector.load %arg1[%c0_32, %c20, %c0_33] : memref<1x110x16xbf16, #tpu.memory_space<vmem>>, vector<1x80x16xbf16>
    %36 = vector.shape_cast %35 : vector<1x80x16xbf16> to vector<80x16xbf16>
    %c6 = arith.constant 6 : index
    %c0_34 = arith.constant 0 : index
    %c0_35 = arith.constant 0 : index
    %37 = vector.load %arg3[%c6, %c0_34, %c0_35] : memref<9x16x48xbf16, #tpu.memory_space<vmem>>, vector<1x16x48xbf16>
    %38 = vector.shape_cast %37 : vector<1x16x48xbf16> to vector<16x48xbf16>
    %cst_36 = arith.constant dense<0.000000e+00> : vector<80x48xf32>
    %39 = tpu.matmul %36, %38, %cst_36 {dimension_numbers = #tpu.dot_dimension_numbers<[1], [0], [0], [1], [0, 0, 1, 1], [], []>} : vector<80x16xbf16>, vector<16x48xbf16>, vector<80x48xf32> -> vector<80x48xf32>
    %40 = arith.addf %34, %39 : vector<80x48xf32>
    %c0_37 = arith.constant 0 : index
    %c21 = arith.constant 21 : index
    %c0_38 = arith.constant 0 : index
    %41 = vector.load %arg1[%c0_37, %c21, %c0_38] : memref<1x110x16xbf16, #tpu.memory_space<vmem>>, vector<1x80x16xbf16>
    %42 = vector.shape_cast %41 : vector<1x80x16xbf16> to vector<80x16xbf16>
    %c7 = arith.constant 7 : index
    %c0_39 = arith.constant 0 : index
    %c0_40 = arith.constant 0 : index
    %43 = vector.load %arg3[%c7, %c0_39, %c0_40] : memref<9x16x48xbf16, #tpu.memory_space<vmem>>, vector<1x16x48xbf16>
    %44 = vector.shape_cast %43 : vector<1x16x48xbf16> to vector<16x48xbf16>
    %cst_41 = arith.constant dense<0.000000e+00> : vector<80x48xf32>
    %45 = tpu.matmul %42, %44, %cst_41 {dimension_numbers = #tpu.dot_dimension_numbers<[1], [0], [0], [1], [0, 0, 1, 1], [], []>} : vector<80x16xbf16>, vector<16x48xbf16>, vector<80x48xf32> -> vector<80x48xf32>
    %46 = arith.addf %40, %45 : vector<80x48xf32>
    %c0_42 = arith.constant 0 : index
    %c22 = arith.constant 22 : index
    %c0_43 = arith.constant 0 : index
    %47 = vector.load %arg1[%c0_42, %c22, %c0_43] : memref<1x110x16xbf16, #tpu.memory_space<vmem>>, vector<1x80x16xbf16>
    %48 = vector.shape_cast %47 : vector<1x80x16xbf16> to vector<80x16xbf16>
    %c8 = arith.constant 8 : index
    %c0_44 = arith.constant 0 : index
    %c0_45 = arith.constant 0 : index
    %49 = vector.load %arg3[%c8, %c0_44, %c0_45] : memref<9x16x48xbf16, #tpu.memory_space<vmem>>, vector<1x16x48xbf16>
    %50 = vector.shape_cast %49 : vector<1x16x48xbf16> to vector<16x48xbf16>
    %cst_46 = arith.constant dense<0.000000e+00> : vector<80x48xf32>
    %51 = tpu.matmul %48, %50, %cst_46 {dimension_numbers = #tpu.dot_dimension_numbers<[1], [0], [0], [1], [0, 0, 1, 1], [], []>} : vector<80x16xbf16>, vector<16x48xbf16>, vector<80x48xf32> -> vector<80x48xf32>
    %52 = arith.addf %46, %51 : vector<80x48xf32>
    %c0_47 = arith.constant 0 : index
    %c0_48 = arith.constant 0 : index
    %c0_49 = arith.constant 0 : index
    %53 = vector.load %arg2[%c0_47, %c0_48, %c0_49] : memref<1x110x8xbf16, #tpu.memory_space<vmem>>, vector<1x80x8xbf16>
    %54 = vector.shape_cast %53 : vector<1x80x8xbf16> to vector<80x8xbf16>
    %c0_50 = arith.constant 0 : index
    %c0_51 = arith.constant 0 : index
    %c0_52 = arith.constant 0 : index
    %55 = vector.load %arg4[%c0_50, %c0_51, %c0_52] : memref<9x8x48xbf16, #tpu.memory_space<vmem>>, vector<1x8x48xbf16>
    %56 = vector.shape_cast %55 : vector<1x8x48xbf16> to vector<8x48xbf16>
    %cst_53 = arith.constant dense<0.000000e+00> : vector<80x48xf32>
    %57 = tpu.matmul %54, %56, %cst_53 {dimension_numbers = #tpu.dot_dimension_numbers<[1], [0], [0], [1], [0, 0, 1, 1], [], []>} : vector<80x8xbf16>, vector<8x48xbf16>, vector<80x48xf32> -> vector<80x48xf32>
    %58 = arith.addf %52, %57 : vector<80x48xf32>
    %c0_54 = arith.constant 0 : index
    %c1_55 = arith.constant 1 : index
    %c0_56 = arith.constant 0 : index
    %59 = vector.load %arg2[%c0_54, %c1_55, %c0_56] : memref<1x110x8xbf16, #tpu.memory_space<vmem>>, vector<1x80x8xbf16>
    %60 = vector.shape_cast %59 : vector<1x80x8xbf16> to vector<80x8xbf16>
    %c1_57 = arith.constant 1 : index
    %c0_58 = arith.constant 0 : index
    %c0_59 = arith.constant 0 : index
    %61 = vector.load %arg4[%c1_57, %c0_58, %c0_59] : memref<9x8x48xbf16, #tpu.memory_space<vmem>>, vector<1x8x48xbf16>
    %62 = vector.shape_cast %61 : vector<1x8x48xbf16> to vector<8x48xbf16>
    %cst_60 = arith.constant dense<0.000000e+00> : vector<80x48xf32>
    %63 = tpu.matmul %60, %62, %cst_60 {dimension_numbers = #tpu.dot_dimension_numbers<[1], [0], [0], [1], [0, 0, 1, 1], [], []>} : vector<80x8xbf16>, vector<8x48xbf16>, vector<80x48xf32> -> vector<80x48xf32>
    %64 = arith.addf %58, %63 : vector<80x48xf32>
    %c0_61 = arith.constant 0 : index
    %c2_62 = arith.constant 2 : index
    %c0_63 = arith.constant 0 : index
    %65 = vector.load %arg2[%c0_61, %c2_62, %c0_63] : memref<1x110x8xbf16, #tpu.memory_space<vmem>>, vector<1x80x8xbf16>
    %66 = vector.shape_cast %65 : vector<1x80x8xbf16> to vector<80x8xbf16>
    %c2_64 = arith.constant 2 : index
    %c0_65 = arith.constant 0 : index
    %c0_66 = arith.constant 0 : index
    %67 = vector.load %arg4[%c2_64, %c0_65, %c0_66] : memref<9x8x48xbf16, #tpu.memory_space<vmem>>, vector<1x8x48xbf16>
    %68 = vector.shape_cast %67 : vector<1x8x48xbf16> to vector<8x48xbf16>
    %cst_67 = arith.constant dense<0.000000e+00> : vector<80x48xf32>
    %69 = tpu.matmul %66, %68, %cst_67 {dimension_numbers = #tpu.dot_dimension_numbers<[1], [0], [0], [1], [0, 0, 1, 1], [], []>} : vector<80x8xbf16>, vector<8x48xbf16>, vector<80x48xf32> -> vector<80x48xf32>
    %70 = arith.addf %64, %69 : vector<80x48xf32>
    %c0_68 = arith.constant 0 : index
    %c10_69 = arith.constant 10 : index
    %c0_70 = arith.constant 0 : index
    %71 = vector.load %arg2[%c0_68, %c10_69, %c0_70] : memref<1x110x8xbf16, #tpu.memory_space<vmem>>, vector<1x80x8xbf16>
    %72 = vector.shape_cast %71 : vector<1x80x8xbf16> to vector<80x8xbf16>
    %c3_71 = arith.constant 3 : index
    %c0_72 = arith.constant 0 : index
    %c0_73 = arith.constant 0 : index
    %73 = vector.load %arg4[%c3_71, %c0_72, %c0_73] : memref<9x8x48xbf16, #tpu.memory_space<vmem>>, vector<1x8x48xbf16>
    %74 = vector.shape_cast %73 : vector<1x8x48xbf16> to vector<8x48xbf16>
    %cst_74 = arith.constant dense<0.000000e+00> : vector<80x48xf32>
    %75 = tpu.matmul %72, %74, %cst_74 {dimension_numbers = #tpu.dot_dimension_numbers<[1], [0], [0], [1], [0, 0, 1, 1], [], []>} : vector<80x8xbf16>, vector<8x48xbf16>, vector<80x48xf32> -> vector<80x48xf32>
    %76 = arith.addf %70, %75 : vector<80x48xf32>
    %c0_75 = arith.constant 0 : index
    %c11_76 = arith.constant 11 : index
    %c0_77 = arith.constant 0 : index
    %77 = vector.load %arg2[%c0_75, %c11_76, %c0_77] : memref<1x110x8xbf16, #tpu.memory_space<vmem>>, vector<1x80x8xbf16>
    %78 = vector.shape_cast %77 : vector<1x80x8xbf16> to vector<80x8xbf16>
    %c4_78 = arith.constant 4 : index
    %c0_79 = arith.constant 0 : index
    %c0_80 = arith.constant 0 : index
    %79 = vector.load %arg4[%c4_78, %c0_79, %c0_80] : memref<9x8x48xbf16, #tpu.memory_space<vmem>>, vector<1x8x48xbf16>
    %80 = vector.shape_cast %79 : vector<1x8x48xbf16> to vector<8x48xbf16>
    %cst_81 = arith.constant dense<0.000000e+00> : vector<80x48xf32>
    %81 = tpu.matmul %78, %80, %cst_81 {dimension_numbers = #tpu.dot_dimension_numbers<[1], [0], [0], [1], [0, 0, 1, 1], [], []>} : vector<80x8xbf16>, vector<8x48xbf16>, vector<80x48xf32> -> vector<80x48xf32>
    %82 = arith.addf %76, %81 : vector<80x48xf32>
    %c0_82 = arith.constant 0 : index
    %c12_83 = arith.constant 12 : index
    %c0_84 = arith.constant 0 : index
    %83 = vector.load %arg2[%c0_82, %c12_83, %c0_84] : memref<1x110x8xbf16, #tpu.memory_space<vmem>>, vector<1x80x8xbf16>
    %84 = vector.shape_cast %83 : vector<1x80x8xbf16> to vector<80x8xbf16>
    %c5_85 = arith.constant 5 : index
    %c0_86 = arith.constant 0 : index
    %c0_87 = arith.constant 0 : index
    %85 = vector.load %arg4[%c5_85, %c0_86, %c0_87] : memref<9x8x48xbf16, #tpu.memory_space<vmem>>, vector<1x8x48xbf16>
    %86 = vector.shape_cast %85 : vector<1x8x48xbf16> to vector<8x48xbf16>
    %cst_88 = arith.constant dense<0.000000e+00> : vector<80x48xf32>
    %87 = tpu.matmul %84, %86, %cst_88 {dimension_numbers = #tpu.dot_dimension_numbers<[1], [0], [0], [1], [0, 0, 1, 1], [], []>} : vector<80x8xbf16>, vector<8x48xbf16>, vector<80x48xf32> -> vector<80x48xf32>
    %88 = arith.addf %82, %87 : vector<80x48xf32>
    %c0_89 = arith.constant 0 : index
    %c20_90 = arith.constant 20 : index
    %c0_91 = arith.constant 0 : index
    %89 = vector.load %arg2[%c0_89, %c20_90, %c0_91] : memref<1x110x8xbf16, #tpu.memory_space<vmem>>, vector<1x80x8xbf16>
    %90 = vector.shape_cast %89 : vector<1x80x8xbf16> to vector<80x8xbf16>
    %c6_92 = arith.constant 6 : index
    %c0_93 = arith.constant 0 : index
    %c0_94 = arith.constant 0 : index
    %91 = vector.load %arg4[%c6_92, %c0_93, %c0_94] : memref<9x8x48xbf16, #tpu.memory_space<vmem>>, vector<1x8x48xbf16>
    %92 = vector.shape_cast %91 : vector<1x8x48xbf16> to vector<8x48xbf16>
    %cst_95 = arith.constant dense<0.000000e+00> : vector<80x48xf32>
    %93 = tpu.matmul %90, %92, %cst_95 {dimension_numbers = #tpu.dot_dimension_numbers<[1], [0], [0], [1], [0, 0, 1, 1], [], []>} : vector<80x8xbf16>, vector<8x48xbf16>, vector<80x48xf32> -> vector<80x48xf32>
    %94 = arith.addf %88, %93 : vector<80x48xf32>
    %c0_96 = arith.constant 0 : index
    %c21_97 = arith.constant 21 : index
    %c0_98 = arith.constant 0 : index
    %95 = vector.load %arg2[%c0_96, %c21_97, %c0_98] : memref<1x110x8xbf16, #tpu.memory_space<vmem>>, vector<1x80x8xbf16>
    %96 = vector.shape_cast %95 : vector<1x80x8xbf16> to vector<80x8xbf16>
    %c7_99 = arith.constant 7 : index
    %c0_100 = arith.constant 0 : index
    %c0_101 = arith.constant 0 : index
    %97 = vector.load %arg4[%c7_99, %c0_100, %c0_101] : memref<9x8x48xbf16, #tpu.memory_space<vmem>>, vector<1x8x48xbf16>
    %98 = vector.shape_cast %97 : vector<1x8x48xbf16> to vector<8x48xbf16>
    %cst_102 = arith.constant dense<0.000000e+00> : vector<80x48xf32>
    %99 = tpu.matmul %96, %98, %cst_102 {dimension_numbers = #tpu.dot_dimension_numbers<[1], [0], [0], [1], [0, 0, 1, 1], [], []>} : vector<80x8xbf16>, vector<8x48xbf16>, vector<80x48xf32> -> vector<80x48xf32>
    %100 = arith.addf %94, %99 : vector<80x48xf32>
    %c0_103 = arith.constant 0 : index
    %c22_104 = arith.constant 22 : index
    %c0_105 = arith.constant 0 : index
    %101 = vector.load %arg2[%c0_103, %c22_104, %c0_105] : memref<1x110x8xbf16, #tpu.memory_space<vmem>>, vector<1x80x8xbf16>
    %102 = vector.shape_cast %101 : vector<1x80x8xbf16> to vector<80x8xbf16>
    %c8_106 = arith.constant 8 : index
    %c0_107 = arith.constant 0 : index
    %c0_108 = arith.constant 0 : index
    %103 = vector.load %arg4[%c8_106, %c0_107, %c0_108] : memref<9x8x48xbf16, #tpu.memory_space<vmem>>, vector<1x8x48xbf16>
    %104 = vector.shape_cast %103 : vector<1x8x48xbf16> to vector<8x48xbf16>
    %cst_109 = arith.constant dense<0.000000e+00> : vector<80x48xf32>
    %105 = tpu.matmul %102, %104, %cst_109 {dimension_numbers = #tpu.dot_dimension_numbers<[1], [0], [0], [1], [0, 0, 1, 1], [], []>} : vector<80x8xbf16>, vector<8x48xbf16>, vector<80x48xf32> -> vector<80x48xf32>
    %106 = arith.addf %100, %105 : vector<80x48xf32>
    %cst_110 = arith.constant 0.000000e+00 : f32
    %107 = vector.broadcast %cst_110 : f32 to vector<80x48xf32>
    %108 = arith.cmpf oge, %106, %107 : vector<80x48xf32>
    %cst_111 = arith.constant 1.000000e-01 : f32
    %109 = vector.broadcast %cst_111 : f32 to vector<80x48xf32>
    %110 = arith.mulf %109, %106 : vector<80x48xf32>
    %111 = arith.select %108, %106, %110 : vector<80x48xi1>, vector<80x48xf32>
    %112 = vector.shape_cast %111 : vector<80x48xf32> to vector<8x10x48xf32>
    %113 = vector.extract_strided_slice %112 {offsets = [0, 0, 0], sizes = [8, 8, 48], strides = [1, 1, 1]} : vector<8x10x48xf32> to vector<8x8x48xf32>
    %114 = arith.truncf %113 : vector<8x8x48xf32> to vector<8x8x48xbf16>
    %c0_112 = arith.constant 0 : index
    %c0_113 = arith.constant 0 : index
    %c0_114 = arith.constant 0 : index
    %c0_115 = arith.constant 0 : index
    %115 = vector.load %arg5[%c0_112, %c0_113, %c0_114, %c0_115] : memref<1x8x8x48xbf16, #tpu.memory_space<vmem>>, vector<1x8x8x48xbf16>
    %116 = vector.shape_cast %115 : vector<1x8x8x48xbf16> to vector<8x8x48xbf16>
    %117 = vector.shape_cast %114 : vector<8x8x48xbf16> to vector<1x8x8x48xbf16>
    tpu.vector_store %arg5[%c0_112, %c0_113, %c0_114, %c0_115], %117 {strides = array<i32>} : memref<1x8x8x48xbf16, #tpu.memory_space<vmem>>, vector<1x8x8x48xbf16>,
    return
  }
  func.func @transform_0(%arg0: i32) -> (i32, i32, i32) {
    %c0_i32 = arith.constant 0 : i32
    %c0_i32_0 = arith.constant 0 : i32
    %c0_i32_1 = arith.constant 0 : i32
    return %arg0, %c0_i32, %c0_i32_0 : i32, i32, i32
  }
  func.func @transform_1(%arg0: i32) -> (i32, i32, i32) {
    %c0_i32 = arith.constant 0 : i32
    %c0_i32_0 = arith.constant 0 : i32
    %c0_i32_1 = arith.constant 0 : i32
    return %arg0, %c0_i32, %c0_i32_0 : i32, i32, i32
  }
  func.func @transform_2(%arg0: i32) -> (i32, i32, i32) {
    %c0_i32 = arith.constant 0 : i32
    %c0_i32_0 = arith.constant 0 : i32
    %c0_i32_1 = arith.constant 0 : i32
    %c0_i32_2 = arith.constant 0 : i32
    return %c0_i32, %c0_i32_0, %c0_i32_1 : i32, i32, i32
  }
  func.func @transform_3(%arg0: i32) -> (i32, i32, i32) {
    %c0_i32 = arith.constant 0 : i32
    %c0_i32_0 = arith.constant 0 : i32
    %c0_i32_1 = arith.constant 0 : i32
    %c0_i32_2 = arith.constant 0 : i32
    return %c0_i32, %c0_i32_0, %c0_i32_1 : i32, i32, i32
  }
  func.func @transform_4(%arg0: i32) -> (i32, i32, i32, i32) {
    %c0_i32 = arith.constant 0 : i32
    %c0_i32_0 = arith.constant 0 : i32
    %c0_i32_1 = arith.constant 0 : i32
    %c0_i32_2 = arith.constant 0 : i32
    return %arg0, %c0_i32, %c0_i32_0, %c0_i32_1 : i32, i32, i32, i32
  }
}

</mosaic_0001>

<llo_original>
// kernel: tpu_custom_call.1
$region0: #{tpu_custom_call.1}
  #allocation0 [shape = 'u32[]', space=smem, size = 0x4, offset = 0x4, fixed_abs, tag = 'smem constant byte address 0x4 - core index']
  #allocation1 [shape = 'u32[72,128]{1,0:T(1,128)}', space=vmem, size = 0x9000, scoped, tag = 'internal scratch']
  %s0 = inlined_call_operand.vmem [shape: bf16[2,110,16], index: 0, kind: input, shape index: {}]
  %s1 = inlined_call_operand.vmem [shape: bf16[2,110,8], index: 1, kind: input, shape index: {}]
  %s2 = inlined_call_operand.vmem [shape: bf16[9,16,48], index: 2, kind: input, shape index: {}]
  %s3 = inlined_call_operand.vmem [shape: bf16[9,8,48], index: 3, kind: input, shape index: {}]
  %s4 = inlined_call_operand.hbm [shape: bf16[2,8,8,48], index: 4, kind: output, shape index: {}]
  %s5 = sld [smem:[#allocation0]]
  $region49: #{tpu_custom_call.1} parent=0
    _
  %s7 = ssub.s32 1, %s5
  %s8 = scalar_select 0, %s7, %s5
  $region1: #{tpu_custom_call.1} parent=0
    #allocation2 [shape = 'u8[32768]{0}', space=vmem, size = 0x8000, scoped, tag = 'output window, operand 0']
    #allocation3 [shape = 's32[2]{0}', space=sflag, size = 0x8, scoped, tag = 'scoped memory for tpu_custom_call.1']
    %9 = vsyncpa [#allocation3], 0
    %s10 = scalar_lea.sflag [#allocation3], 1
    %11 = vsyncpa %s10, 0
    loop: start=0, step=1, limit=4
    $region2: #{tpu_custom_call.1} parent=1 // loop_pre_header
      _
    $region3: #{tpu_custom_call.1} parent=1 // loop_header
      %s13 = sphi 0, %s17
      %p14 = scmp.ge.s32.totalorder %s13, 4
      %s23 = sphi 0, %s25
      %s26 = sphi 0, %s23
      %s27 = sphi 0, %s26
      %s43 = sphi 0, %s27
      %s49 = sphi 0, %s51
      %s52 = sphi 0, %s49
      %s53 = sphi 0, %s52
      %s69 = sphi 0, %s53
      %s73 = sphi 0, %s73
      %s75 = sphi 0, %s73
      %s76 = sphi 0, %s75
      %s90 = sphi 0, %s76
      %s94 = sphi 0, %s94
      %s96 = sphi 0, %s94
      %s97 = sphi 0, %s96
      %s111 = sphi 0, %s97
      %s117 = sphi 0, %s119
      %s120 = sphi 0, %s117
      %s121 = sphi 0, %s120
      %s137 = sphi 0, %s121
    $region4: #{tpu_custom_call.1} parent=1 // loop_header_branch
      %16 = sbr.rel (%p14) target = $region8
    $region5: #{tpu_custom_call.1} parent=1 // loop_body
      %s18 = ssub.s32 %s13, 1
      %s19 = ssub.s32 %s13, 2
      %s20 = sadd.s32 %s13, 1
      %s21 = ssub.s32 %s13, %s20
      %p22 = scmp.eq.s32.totalorder %s21, 0
      %s24 = sadd.s32 %s23, 1
      %s25 = scalar_select %p22, %s23, %s24
      %p28 = pneg %p22
      %p29 = scmp.eq.s32.totalorder %s13, 1
      %p30 = por %p28, %p29
      %p31 = scmp.ne.s32.totalorder %s23, %s26
      %p32 = scmp.eq.s32.totalorder %s13, 0
      %p33 = por %p31, %p32
      %p34 = scmp.ne.s32.totalorder %s23, %s26
      %p35 = scmp.eq.s32.totalorder %s18, 1
      %p36 = por %p34, %p35
      %p37 = scmp.ne.s32.totalorder %s26, %s27
      %p38 = scmp.eq.s32.totalorder %s18, 0
      %p39 = por %p37, %p38
      %p40 = scmp.ne.s32.totalorder %s26, %s27
      %p41 = scmp.eq.s32.totalorder %s19, 1
      %p42 = por %p40, %p41
      %p44 = scmp.ne.s32.totalorder %s27, %s43
      %p45 = scmp.eq.s32.totalorder %s19, 0
      %p46 = por %p44, %p45
      %s47 = ssub.s32 %s13, %s20
      %p48 = scmp.eq.s32.totalorder %s47, 0
      %s50 = sadd.s32 %s49, 1
      %s51 = scalar_select %p48, %s49, %s50
      %p54 = pneg %p48
      %p55 = scmp.eq.s32.totalorder %s13, 1
      %p56 = por %p54, %p55
      %p57 = scmp.ne.s32.totalorder %s49, %s52
      %p58 = scmp.eq.s32.totalorder %s13, 0
      %p59 = por %p57, %p58
      %p60 = scmp.ne.s32.totalorder %s49, %s52
      %p61 = scmp.eq.s32.totalorder %s18, 1
      %p62 = por %p60, %p61
      %p63 = scmp.ne.s32.totalorder %s52, %s53
      %p64 = scmp.eq.s32.totalorder %s18, 0
      %p65 = por %p63, %p64
      %p66 = scmp.ne.s32.totalorder %s52, %s53
      %p67 = scmp.eq.s32.totalorder %s19, 1
      %p68 = por %p66, %p67
      %p70 = scmp.ne.s32.totalorder %s53, %s69
      %p71 = scmp.eq.s32.totalorder %s19, 0
      %p72 = por %p70, %p71
      %s74 = sadd.s32 %s73, 1
      %p77 = scmp.eq.s32.totalorder %s13, 1
      %p78 = scmp.ne.s32.totalorder %s73, %s75
      %p79 = scmp.eq.s32.totalorder %s13, 0
      %p80 = por %p78, %p79
      %p81 = scmp.ne.s32.totalorder %s73, %s75
      %p82 = scmp.eq.s32.totalorder %s18, 1
      %p83 = por %p81, %p82
      %p84 = scmp.ne.s32.totalorder %s75, %s76
      %p85 = scmp.eq.s32.totalorder %s18, 0
      %p86 = por %p84, %p85
      %p87 = scmp.ne.s32.totalorder %s75, %s76
      %p88 = scmp.eq.s32.totalorder %s19, 1
      %p89 = por %p87, %p88
      %p91 = scmp.ne.s32.totalorder %s76, %s90
      %p92 = scmp.eq.s32.totalorder %s19, 0
      %p93 = por %p91, %p92
      %s95 = sadd.s32 %s94, 1
      %p98 = scmp.eq.s32.totalorder %s13, 1
      %p99 = scmp.ne.s32.totalorder %s94, %s96
      %p100 = scmp.eq.s32.totalorder %s13, 0
      %p101 = por %p99, %p100
      %p102 = scmp.ne.s32.totalorder %s94, %s96
      %p103 = scmp.eq.s32.totalorder %s18, 1
      %p104 = por %p102, %p103
      %p105 = scmp.ne.s32.totalorder %s96, %s97
      %p106 = scmp.eq.s32.totalorder %s18, 0
      %p107 = por %p105, %p106
      %p108 = scmp.ne.s32.totalorder %s96, %s97
      %p109 = scmp.eq.s32.totalorder %s19, 1
      %p110 = por %p108, %p109
      %p112 = scmp.ne.s32.totalorder %s97, %s111
      %p113 = scmp.eq.s32.totalorder %s19, 0
      %p114 = por %p112, %p113
      %s115 = ssub.s32 %s13, %s20
      %p116 = scmp.eq.s32.totalorder %s115, 0
      %s118 = sadd.s32 %s117, 1
      %s119 = scalar_select %p116, %s117, %s118
      %p122 = pneg %p116
      %p123 = scmp.eq.s32.totalorder %s13, 1
      %p124 = por %p122, %p123
      %p125 = scmp.ne.s32.totalorder %s117, %s120
      %p126 = scmp.eq.s32.totalorder %s13, 0
      %p127 = por %p125, %p126
      %p128 = scmp.ne.s32.totalorder %s117, %s120
      %p129 = scmp.eq.s32.totalorder %s18, 1
      %p130 = por %p128, %p129
      %p131 = scmp.ne.s32.totalorder %s120, %s121
      %p132 = scmp.eq.s32.totalorder %s18, 0
      %p133 = por %p131, %p132
      %p134 = scmp.ne.s32.totalorder %s120, %s121
      %p135 = scmp.eq.s32.totalorder %s19, 1
      %p136 = por %p134, %p135
      %p138 = scmp.ne.s32.totalorder %s121, %s137
      %p139 = scmp.eq.s32.totalorder %s19, 0
      %p140 = por %p138, %p139
      %p141 = scmp.le.s32.totalorder 1, %s13
      %p142 = scmp.lt.s32.totalorder %s13, 3
      %p143 = pnand %p141, %p142
      %p144 = pneg %p143
      // Predicated region
      $region9: #{tpu_custom_call.1} parent=5 // pred_check
        _
      $region10: #{tpu_custom_call.1} parent=5 // pred_check_branch
        %146 = sbr.rel (%p143) target = $region12
      $region11: #{tpu_custom_call.1} parent=5 // pred_region
        %s147 = ssub.s32 %s13, 1
        // Predicated region
        $region13: #{tpu_custom_call.1} parent=11 // pred_check
          %p148 = pneg %p86
        $region14: #{tpu_custom_call.1} parent=11 // pred_check_branch
          %150 = sbr.rel (%p148) target = $region16
        $region15: #{tpu_custom_call.1} parent=11 // pred_region
          _
        $region16: #{tpu_custom_call.1} parent=11 // pred_fallthru
          _
        // Predicated region
        $region17: #{tpu_custom_call.1} parent=11 // pred_check
          %p151 = pneg %p107
        $region18: #{tpu_custom_call.1} parent=11 // pred_check_branch
          %153 = sbr.rel (%p151) target = $region20
        $region19: #{tpu_custom_call.1} parent=11 // pred_region
          _
        $region20: #{tpu_custom_call.1} parent=11 // pred_fallthru
          _
      $region12: #{tpu_custom_call.1} parent=5 // pred_fallthru
        _
      %p154 = scmp.lt.s32.totalorder %s13, 2
      // Predicated region
      $region21: #{tpu_custom_call.1} parent=5 // pred_check
        %p155 = pneg %p154
      $region22: #{tpu_custom_call.1} parent=5 // pred_check_branch
        %157 = sbr.rel (%p155) target = $region24
      $region23: #{tpu_custom_call.1} parent=5 // pred_region
        // Predicated region
        $region25: #{tpu_custom_call.1} parent=23 // pred_check
          %p158 = pneg %p33
        $region26: #{tpu_custom_call.1} parent=23 // pred_check_branch
          %160 = sbr.rel (%p158) target = $region28
        $region27: #{tpu_custom_call.1} parent=23 // pred_region
          %p161 = scmp.lt.s32.totalorder %s13, 1
          %s162 = scalar_select %p161, %s13, 1
          %s163 = smul.addr %s162, 14
          %s164 = smul.addr %s163, 4
          %s165 = scalar_lea.vmem %s0, %s164
        $region28: #{tpu_custom_call.1} parent=23 // pred_fallthru
          _
        // Predicated region
        $region29: #{tpu_custom_call.1} parent=23 // pred_check
          %p166 = pneg %p59
        $region30: #{tpu_custom_call.1} parent=23 // pred_check_branch
          %168 = sbr.rel (%p166) target = $region32
        $region31: #{tpu_custom_call.1} parent=23 // pred_region
          %p169 = scmp.lt.s32.totalorder %s13, 1
          %s170 = scalar_select %p169, %s13, 1
          %s171 = smul.addr %s170, 14
          %s172 = smul.addr %s171, 4
          %s173 = scalar_lea.vmem %s1, %s172
        $region32: #{tpu_custom_call.1} parent=23 // pred_fallthru
          _
      $region24: #{tpu_custom_call.1} parent=5 // pred_fallthru
        _
      %p174 = scmp.le.s32.totalorder 1, %s13
      %p175 = scmp.lt.s32.totalorder %s13, 3
      %p176 = pnand %p174, %p175
      %p177 = pneg %p176
      // Predicated region
      $region33: #{tpu_custom_call.1} parent=5 // pred_check
        _
      $region34: #{tpu_custom_call.1} parent=5 // pred_check_branch
        %179 = sbr.rel (%p176) target = $region36
      $region35: #{tpu_custom_call.1} parent=5 // pred_region
        %s180 = ssub.s32 %s13, 1
        %p181 = scmp.lt.s32.totalorder %s18, 1
        %s182 = scalar_select %p181, %s18, 1
        %s183 = smul.addr %s182, 14
        %s184 = smul.addr %s183, 4
        %s185 = scalar_lea.vmem %s0, %s184
        %p186 = pneg %p39
        %p187 = pneg %p36
        %p188 = scmp.lt.s32.totalorder %s18, 1
        %s189 = scalar_select %p188, %s18, 1
        %s190 = smul.addr %s189, 14
        %s191 = smul.addr %s190, 4
        %s192 = scalar_lea.vmem %s1, %s191
        %p193 = pneg %p65
        %p194 = pneg %p62
        %p195 = pneg %p86
        %p196 = pneg %p83
        %p197 = pneg %p107
        %p198 = pneg %p104
        %p199 = pneg %p133
        %p200 = pneg %p130
        %s201 = sand.u32 %s120, 1
        %s202 = scalar_lea.sflag [#allocation3], %s201
        %s203 = sand.u32 %s120, 1
        %s204 = smul.addr %s203, 32
        %s205 = scalar_lea.vmem [#allocation2], %s204
        %p206 = scmp.lt.s32.totalorder %s18, 1
        %s207 = scalar_select %p206, %s18, 1
        %s208 = smul.addr %s207, 14
        %s209 = smul.addr %s208, 4
        %s210 = scalar_lea.vmem %s0, %s209
        %p211 = scmp.lt.s32.totalorder %s18, 1
        %s212 = scalar_select %p211, %s18, 1
        %s213 = smul.addr %s212, 14
        %s214 = smul.addr %s213, 4
        %s215 = scalar_lea.vmem %s1, %s214
        %v217 = vld [vmem:[%s210] sm:$0xf]
        %v218 = vld [vmem:[%s210 + $0x4] sm:$0xf]
        %v219 = vld [vmem:[%s210 + $0x8] sm:$0xf]
        %v220 = vld [vmem:[%s210 + $0xc] sm:$0xf]
        %v221 = vld [vmem:[%s210 + $0x10] sm:$0xf]
        %v222 = vld [vmem:[%s210 + $0x14] sm:$0xf]
        %v223 = vld [vmem:[%s210 + $0x18] sm:$0xf]
        %v224 = vld [vmem:[%s210 + $0x1c] sm:$0xf]
        %v225 = vld [vmem:[%s210 + $0x20] sm:$0xf]
        %v226 = vld [vmem:[%s210 + $0x24] sm:$0xf]
        %v227 = vld [vmem:[%s2] sm:$0xf]
        %v228 = vld [vmem:[%s2 + $0x4] sm:$0xf]
        %v229 = vld [vmem:[%s210 + $0x28] sm:$0x1]
        %s230 = scalar_lea.vmem %s2, 8
        %v231 = vld [vmem:[%s230] sm:$0xf]
        %v232 = vld [vmem:[%s230 + $0x4] sm:$0xf]
        %v244 = vunpack.c.l.b16 %v217
        %v245 = vunpack.c.l.b16 %v218
        %v246 = vunpack.c.l.b16 %v219
        %v247 = vunpack.c.l.b16 %v220
        %v248 = vunpack.c.l.b16 %v221
        %v249 = vunpack.c.l.b16 %v222
        %v250 = vunpack.c.l.b16 %v223
        %v251 = vunpack.c.l.b16 %v224
        %v252 = vunpack.c.l.b16 %v225
        %v253 = vunpack.c.l.b16 %v226
        %v254 = vunpack.c.l.b16 %v229
        %v255 = vpack.c.b16 %v245, %v244
        %v256 = vpack.c.b16 %v247, %v246
        %v257 = vpack.c.b16 %v249, %v248
        %v258 = vpack.c.b16 %v251, %v250
        %v259 = vpack.c.b16 %v253, %v252
        %v260 = vpack.c.b16 %v254, %v254
        %vm261 = vsmask.f32 7424
        %v263 = vshrl.u32 %v255, 16
        %v265 = vshll.u32 %v255, 16
        %v267 = vrot.slane %v265, 1
        %v268 = vor.u32 %v263, %v267
        %v270 = vshll.u32 %v256, 16
        %v272 = vrot.slane %v270, 1
        %v273 = vsel %vm261, %v268, %v272
        %v274 = vshrl.u32 %v256, 16
        %v276 = vor.u32 %v274, %v272
        %v278 = vshll.u32 %v257, 16
        %v280 = vrot.slane %v278, 1
        %v281 = vsel %vm261, %v276, %v280
        %v282 = vshrl.u32 %v257, 16
        %v284 = vor.u32 %v282, %v280
        %v286 = vshll.u32 %v258, 16
        %v288 = vrot.slane %v286, 1
        %v289 = vsel %vm261, %v284, %v288
        %v290 = vshrl.u32 %v258, 16
        %v292 = vor.u32 %v290, %v288
        %v294 = vshll.u32 %v259, 16
        %v296 = vrot.slane %v294, 1
        %v297 = vsel %vm261, %v292, %v296
        %v298 = vshrl.u32 %v259, 16
        %v300 = vor.u32 %v298, %v296
        %v302 = vshll.u32 %v260, 16
        %v304 = vrot.slane %v302, 1
        %v305 = vsel %vm261, %v300, %v304
        %v308 = vunpack.c.l.b16 %v231
        %v309 = vunpack.c.l.b16 %v232
        %v310 = vpack.c.b16 %v309, %v308
        %vm312 = vcmask 130048
        %v314 = vsel %vm312, %v273, 0
        %v317 = vsel %vm312, %v281, 0
        %v320 = vsel %vm312, %v289, 0
        %v323 = vsel %vm312, %v297, 0
        %v326 = vsel %vm312, %v305, 0
        %328 = vmatpush.bf16.msra.mxu0 0
        %329 = vmatpush.bf16.msra.mxu0 0
        %330 = vmatpush.bf16.msra.mxu0 0
        %331 = vmatpush.bf16.msra.mxu0 0
        %332 = vmatpush.bf16.msra.mxu0 0
        %333 = vmatpush.bf16.msra.mxu0 0
        %334 = vmatpush.bf16.msra.mxu0 0
        %335 = vmatpush.bf16.msra.mxu0 %v310
        %336 = vmatmul.bf16.gmra.mxu0 %v314
        %v337 = vpop.f32.mrf.mxu0
        %v338 = vadd.f32 0.0, %v337
        %v339 = vpop.f32.mrf.mxu0
        %v340 = vadd.f32 0.0, %v339
        %341 = vmatmul.bf16.gmra.mxu0 %v317
        %v342 = vpop.f32.mrf.mxu0
        %v343 = vadd.f32 0.0, %v342
        %v344 = vpop.f32.mrf.mxu0
        %v345 = vadd.f32 0.0, %v344
        %346 = vmatmul.bf16.gmra.mxu0 %v320
        %v347 = vpop.f32.mrf.mxu0
        %v348 = vadd.f32 0.0, %v347
        %v349 = vpop.f32.mrf.mxu0
        %v350 = vadd.f32 0.0, %v349
        %351 = vmatmul.bf16.gmra.mxu0 %v323
        %v352 = vpop.f32.mrf.mxu0
        %v353 = vadd.f32 0.0, %v352
        %v354 = vpop.f32.mrf.mxu0
        %v355 = vadd.f32 0.0, %v354
        %356 = vmatmul.bf16.gmra.mxu0 %v326
        %v357 = vpop.f32.mrf.mxu0
        %v358 = vadd.f32 0.0, %v357
        %v359 = vpop.f32.mrf.mxu0
        %v360 = vadd.f32 0.0, %v359
        %361 = vdwg.mxu0
        %v364 = vunpack.c.l.b16 %v227
        %v365 = vunpack.c.l.b16 %v228
        %v366 = vpack.c.b16 %v365, %v364
        %v368 = vsel %vm312, %v255, 0
        %v370 = vsel %vm312, %v256, 0
        %v372 = vsel %vm312, %v257, 0
        %v374 = vsel %vm312, %v258, 0
        %v376 = vsel %vm312, %v259, 0
        %378 = vmatpush.bf16.msra.mxu0 0
        %379 = vmatpush.bf16.msra.mxu0 0
        %380 = vmatpush.bf16.msra.mxu0 0
        %381 = vmatpush.bf16.msra.mxu0 0
        %382 = vmatpush.bf16.msra.mxu0 0
        %383 = vmatpush.bf16.msra.mxu0 0
        %384 = vmatpush.bf16.msra.mxu0 0
        %385 = vmatpush.bf16.msra.mxu0 %v366
        %386 = vmatmul.bf16.gmra.mxu0 %v368
        %v387 = vpop.f32.mrf.mxu0
        %v388 = vadd.f32 %v338, %v387
        %v389 = vpop.f32.mrf.mxu0
        %v390 = vadd.f32 %v340, %v389
        %391 = vmatmul.bf16.gmra.mxu0 %v370
        %v392 = vpop.f32.mrf.mxu0
        %v393 = vadd.f32 %v343, %v392
        %v394 = vpop.f32.mrf.mxu0
        %v395 = vadd.f32 %v345, %v394
        %396 = vmatmul.bf16.gmra.mxu0 %v372
        %v397 = vpop.f32.mrf.mxu0
        %v398 = vadd.f32 %v348, %v397
        %v399 = vpop.f32.mrf.mxu0
        %v400 = vadd.f32 %v350, %v399
        %401 = vmatmul.bf16.gmra.mxu0 %v374
        %v402 = vpop.f32.mrf.mxu0
        %v403 = vadd.f32 %v353, %v402
        %v404 = vpop.f32.mrf.mxu0
        %v405 = vadd.f32 %v355, %v404
        %406 = vmatmul.bf16.gmra.mxu0 %v376
        %v407 = vpop.f32.mrf.mxu0
        %v408 = vadd.f32 %v358, %v407
        %v409 = vpop.f32.mrf.mxu0
        %v410 = vadd.f32 %v360, %v409
        %411 = vdwg.mxu0
        %v412 = vld [vmem:[%s210] sm:$0xe]
        %s413 = scalar_lea.vmem %s2, 16
        %v414 = vld [vmem:[%s413] sm:$0xf]
        %v415 = vld [vmem:[%s413 + $0x4] sm:$0xf]
        %v417 = vunpack.c.l.b16 %v412
        %v418 = vpack.c.b16 %v245, %v417
        %vm419 = vcmask 1046528
        %v420 = vrot.slane %v418, 1
        %v421 = vrot.slane %v256, 1
        %v422 = vsel %vm419, %v420, %v421
        %v423 = vrot.slane %v257, 1
        %v424 = vsel %vm419, %v421, %v423
        %v425 = vrot.slane %v258, 1
        %v426 = vsel %vm419, %v423, %v425
        %v427 = vrot.slane %v259, 1
        %v428 = vsel %vm419, %v425, %v427
        %v429 = vrot.slane %v260, 1
        %v430 = vsel %vm419, %v427, %v429
        %v433 = vunpack.c.l.b16 %v414
        %v434 = vunpack.c.l.b16 %v415
        %v435 = vpack.c.b16 %v434, %v433
        %v438 = vsel %vm312, %v422, 0
        %v441 = vsel %vm312, %v424, 0
        %v444 = vsel %vm312, %v426, 0
        %v447 = vsel %vm312, %v428, 0
        %v450 = vsel %vm312, %v430, 0
        %452 = vmatpush.bf16.msra.mxu0 0
        %453 = vmatpush.bf16.msra.mxu0 0
        %454 = vmatpush.bf16.msra.mxu0 0
        %455 = vmatpush.bf16.msra.mxu0 0
        %456 = vmatpush.bf16.msra.mxu0 0
        %457 = vmatpush.bf16.msra.mxu0 0
        %458 = vmatpush.bf16.msra.mxu0 0
        %459 = vmatpush.bf16.msra.mxu0 %v435
        %460 = vmatmul.bf16.gmra.mxu0 %v438
        %v461 = vpop.f32.mrf.mxu0
        %v462 = vadd.f32 0.0, %v461
        %v463 = vpop.f32.mrf.mxu0
        %v464 = vadd.f32 0.0, %v463
        %465 = vmatmul.bf16.gmra.mxu0 %v441
        %v466 = vpop.f32.mrf.mxu0
        %v467 = vadd.f32 0.0, %v466
        %v468 = vpop.f32.mrf.mxu0
        %v469 = vadd.f32 0.0, %v468
        %470 = vmatmul.bf16.gmra.mxu0 %v444
        %v471 = vpop.f32.mrf.mxu0
        %v472 = vadd.f32 0.0, %v471
        %v473 = vpop.f32.mrf.mxu0
        %v474 = vadd.f32 0.0, %v473
        %475 = vmatmul.bf16.gmra.mxu0 %v447
        %v476 = vpop.f32.mrf.mxu0
        %v477 = vadd.f32 0.0, %v476
        %v478 = vpop.f32.mrf.mxu0
        %v479 = vadd.f32 0.0, %v478
        %480 = vmatmul.bf16.gmra.mxu0 %v450
        %v481 = vpop.f32.mrf.mxu0
        %v482 = vadd.f32 0.0, %v481
        %v483 = vpop.f32.mrf.mxu0
        %v484 = vadd.f32 0.0, %v483
        %485 = vdwg.mxu0
        %v486 = vadd.f32 %v388, %v462
        %v487 = vadd.f32 %v390, %v464
        %v488 = vadd.f32 %v393, %v467
        %v489 = vadd.f32 %v395, %v469
        %v490 = vadd.f32 %v398, %v472
        %v491 = vadd.f32 %v400, %v474
        %v492 = vadd.f32 %v403, %v477
        %v493 = vadd.f32 %v405, %v479
        %v494 = vadd.f32 %v408, %v482
        %v495 = vadd.f32 %v410, %v484
        %v496 = vld [vmem:[%s210 + $0x4] sm:$0xe]
        %v497 = vld [vmem:[%s210 + $0x8] sm:$0xf]
        %v498 = vld [vmem:[%s210 + $0xc] sm:$0xf]
        %v499 = vld [vmem:[%s210 + $0x10] sm:$0xf]
        %v500 = vld [vmem:[%s210 + $0x14] sm:$0xf]
        %v501 = vld [vmem:[%s210 + $0x18] sm:$0xf]
        %v502 = vld [vmem:[%s210 + $0x1c] sm:$0xf]
        %v503 = vld [vmem:[%s210 + $0x20] sm:$0xf]
        %v504 = vld [vmem:[%s210 + $0x24] sm:$0xf]
        %v505 = vld [vmem:[%s210 + $0x28] sm:$0xf]
        %v506 = vld [vmem:[%s210 + $0x2c] sm:$0x1]
        %s507 = scalar_lea.vmem %s2, 24
        %v508 = vld [vmem:[%s507] sm:$0xf]
        %v509 = vld [vmem:[%s507 + $0x4] sm:$0xf]
        %v521 = vunpack.c.l.b16 %v496
        %v522 = vunpack.c.l.b16 %v497
        %v523 = vunpack.c.l.b16 %v498
        %v524 = vunpack.c.l.b16 %v499
        %v525 = vunpack.c.l.b16 %v500
        %v526 = vunpack.c.l.b16 %v501
        %v527 = vunpack.c.l.b16 %v502
        %v528 = vunpack.c.l.b16 %v503
        %v529 = vunpack.c.l.b16 %v504
        %v530 = vunpack.c.l.b16 %v505
        %v531 = vunpack.c.l.b16 %v506
        %v532 = vpack.c.b16 %v522, %v521
        %v533 = vpack.c.b16 %v524, %v523
        %v534 = vpack.c.b16 %v526, %v525
        %v535 = vpack.c.b16 %v528, %v527
        %v536 = vpack.c.b16 %v530, %v529
        %v537 = vpack.c.b16 %v531, %v531
        %v538 = vrot.slane %v532, 1
        %v539 = vrot.slane %v533, 1
        %v540 = vsel %vm419, %v538, %v539
        %v541 = vrot.slane %v534, 1
        %v542 = vsel %vm419, %v539, %v541
        %v543 = vrot.slane %v535, 1
        %v544 = vsel %vm419, %v541, %v543
        %v545 = vrot.slane %v536, 1
        %v546 = vsel %vm419, %v543, %v545
        %v547 = vrot.slane %v537, 1
        %v548 = vsel %vm419, %v545, %v547
        %v551 = vunpack.c.l.b16 %v508
        %v552 = vunpack.c.l.b16 %v509
        %v553 = vpack.c.b16 %v552, %v551
        %v556 = vsel %vm312, %v540, 0
        %v559 = vsel %vm312, %v542, 0
        %v562 = vsel %vm312, %v544, 0
        %v565 = vsel %vm312, %v546, 0
        %v568 = vsel %vm312, %v548, 0
        %570 = vmatpush.bf16.msra.mxu0 0
        %571 = vmatpush.bf16.msra.mxu0 0
        %572 = vmatpush.bf16.msra.mxu0 0
        %573 = vmatpush.bf16.msra.mxu0 0
        %574 = vmatpush.bf16.msra.mxu0 0
        %575 = vmatpush.bf16.msra.mxu0 0
        %576 = vmatpush.bf16.msra.mxu0 0
        %577 = vmatpush.bf16.msra.mxu0 %v553
        %578 = vmatmul.bf16.gmra.mxu0 %v556
        %v579 = vpop.f32.mrf.mxu0
        %v580 = vadd.f32 0.0, %v579
        %v581 = vpop.f32.mrf.mxu0
        %v582 = vadd.f32 0.0, %v581
        %583 = vmatmul.bf16.gmra.mxu0 %v559
        %v584 = vpop.f32.mrf.mxu0
        %v585 = vadd.f32 0.0, %v584
        %v586 = vpop.f32.mrf.mxu0
        %v587 = vadd.f32 0.0, %v586
        %588 = vmatmul.bf16.gmra.mxu0 %v562
        %v589 = vpop.f32.mrf.mxu0
        %v590 = vadd.f32 0.0, %v589
        %v591 = vpop.f32.mrf.mxu0
        %v592 = vadd.f32 0.0, %v591
        %593 = vmatmul.bf16.gmra.mxu0 %v565
        %v594 = vpop.f32.mrf.mxu0
        %v595 = vadd.f32 0.0, %v594
        %v596 = vpop.f32.mrf.mxu0
        %v597 = vadd.f32 0.0, %v596
        %598 = vmatmul.bf16.gmra.mxu0 %v568
        %v599 = vpop.f32.mrf.mxu0
        %v600 = vadd.f32 0.0, %v599
        %v601 = vpop.f32.mrf.mxu0
        %v602 = vadd.f32 0.0, %v601
        %603 = vdwg.mxu0
        %v604 = vadd.f32 %v486, %v580
        %v605 = vadd.f32 %v487, %v582
        %v606 = vadd.f32 %v488, %v585
        %v607 = vadd.f32 %v489, %v587
        %v608 = vadd.f32 %v490, %v590
        %v609 = vadd.f32 %v491, %v592
        %v610 = vadd.f32 %v492, %v595
        %v611 = vadd.f32 %v493, %v597
        %v612 = vadd.f32 %v494, %v600
        %v613 = vadd.f32 %v495, %v602
        %v614 = vld [vmem:[%s210 + $0x2c] sm:$0x3]
        %s615 = scalar_lea.vmem %s2, 32
        %v616 = vld [vmem:[%s615] sm:$0xf]
        %v617 = vld [vmem:[%s615 + $0x4] sm:$0xf]
        %v619 = vunpack.c.l.b16 %v614
        %v620 = vpack.c.b16 %v619, %v619
        %vm621 = vsmask.f32 6400
        %v623 = vshrl.u32 %v532, 16
        %v625 = vrot.slane %v623, 1
        %v626 = vshll.u32 %v532, 16
        %v628 = vrot.slane %v626, 2
        %v629 = vor.u32 %v625, %v628
        %v631 = vshrl.u32 %v533, 16
        %v633 = vrot.slane %v631, 1
        %v634 = vshll.u32 %v533, 16
        %v636 = vrot.slane %v634, 2
        %v637 = vor.u32 %v633, %v636
        %v638 = vsel %vm621, %v629, %v637
        %v640 = vshrl.u32 %v534, 16
        %v642 = vrot.slane %v640, 1
        %v643 = vshll.u32 %v534, 16
        %v645 = vrot.slane %v643, 2
        %v646 = vor.u32 %v642, %v645
        %v647 = vsel %vm621, %v637, %v646
        %v649 = vshrl.u32 %v535, 16
        %v651 = vrot.slane %v649, 1
        %v652 = vshll.u32 %v535, 16
        %v654 = vrot.slane %v652, 2
        %v655 = vor.u32 %v651, %v654
        %v656 = vsel %vm621, %v646, %v655
        %v658 = vshrl.u32 %v536, 16
        %v660 = vrot.slane %v658, 1
        %v661 = vshll.u32 %v536, 16
        %v663 = vrot.slane %v661, 2
        %v664 = vor.u32 %v660, %v663
        %v665 = vsel %vm621, %v655, %v664
        %v667 = vshrl.u32 %v620, 16
        %v669 = vrot.slane %v667, 1
        %v670 = vshll.u32 %v620, 16
        %v672 = vrot.slane %v670, 2
        %v673 = vor.u32 %v669, %v672
        %v674 = vsel %vm621, %v664, %v673
        %v677 = vunpack.c.l.b16 %v616
        %v678 = vunpack.c.l.b16 %v617
        %v679 = vpack.c.b16 %v678, %v677
        %v682 = vsel %vm312, %v638, 0
        %v685 = vsel %vm312, %v647, 0
        %v688 = vsel %vm312, %v656, 0
        %v691 = vsel %vm312, %v665, 0
        %v694 = vsel %vm312, %v674, 0
        %696 = vmatpush.bf16.msra.mxu0 0
        %697 = vmatpush.bf16.msra.mxu0 0
        %698 = vmatpush.bf16.msra.mxu0 0
        %699 = vmatpush.bf16.msra.mxu0 0
        %700 = vmatpush.bf16.msra.mxu0 0
        %701 = vmatpush.bf16.msra.mxu0 0
        %702 = vmatpush.bf16.msra.mxu0 0
        %703 = vmatpush.bf16.msra.mxu0 %v679
        %704 = vmatmul.bf16.gmra.mxu0 %v682
        %v705 = vpop.f32.mrf.mxu0
        %v706 = vadd.f32 0.0, %v705
        %v707 = vpop.f32.mrf.mxu0
        %v708 = vadd.f32 0.0, %v707
        %709 = vmatmul.bf16.gmra.mxu0 %v685
        %v710 = vpop.f32.mrf.mxu0
        %v711 = vadd.f32 0.0, %v710
        %v712 = vpop.f32.mrf.mxu0
        %v713 = vadd.f32 0.0, %v712
        %714 = vmatmul.bf16.gmra.mxu0 %v688
        %v715 = vpop.f32.mrf.mxu0
        %v716 = vadd.f32 0.0, %v715
        %v717 = vpop.f32.mrf.mxu0
        %v718 = vadd.f32 0.0, %v717
        %719 = vmatmul.bf16.gmra.mxu0 %v691
        %v720 = vpop.f32.mrf.mxu0
        %v721 = vadd.f32 0.0, %v720
        %v722 = vpop.f32.mrf.mxu0
        %v723 = vadd.f32 0.0, %v722
        %724 = vmatmul.bf16.gmra.mxu0 %v694
        %v725 = vpop.f32.mrf.mxu0
        %v726 = vadd.f32 0.0, %v725
        %v727 = vpop.f32.mrf.mxu0
        %v728 = vadd.f32 0.0, %v727
        %729 = vdwg.mxu0
        %v730 = vadd.f32 %v604, %v706
        %v731 = vadd.f32 %v605, %v708
        %v732 = vadd.f32 %v606, %v711
        %v733 = vadd.f32 %v607, %v713
        %v734 = vadd.f32 %v608, %v716
        %v735 = vadd.f32 %v609, %v718
        %v736 = vadd.f32 %v610, %v721
        %v737 = vadd.f32 %v611, %v723
        %v738 = vadd.f32 %v612, %v726
        %v739 = vadd.f32 %v613, %v728
        %v740 = vld [vmem:[%s210 + $0x4] sm:$0xc]
        %s741 = scalar_lea.vmem %s2, 40
        %v742 = vld [vmem:[%s741] sm:$0xf]
        %v743 = vld [vmem:[%s741 + $0x4] sm:$0xf]
        %v745 = vunpack.c.l.b16 %v740
        %v746 = vpack.c.b16 %v522, %v745
        %vm747 = vcmask 1045504
        %v748 = vrot.slane %v746, 2
        %v749 = vrot.slane %v533, 2
        %v750 = vsel %vm747, %v748, %v749
        %v751 = vrot.slane %v534, 2
        %v752 = vsel %vm747, %v749, %v751
        %v753 = vrot.slane %v535, 2
        %v754 = vsel %vm747, %v751, %v753
        %v755 = vrot.slane %v536, 2
        %v756 = vsel %vm747, %v753, %v755
        %v757 = vrot.slane %v620, 2
        %v758 = vsel %vm747, %v755, %v757
        %v761 = vunpack.c.l.b16 %v742
        %v762 = vunpack.c.l.b16 %v743
        %v763 = vpack.c.b16 %v762, %v761
        %v766 = vsel %vm312, %v750, 0
        %v769 = vsel %vm312, %v752, 0
        %v772 = vsel %vm312, %v754, 0
        %v775 = vsel %vm312, %v756, 0
        %v778 = vsel %vm312, %v758, 0
        %780 = vmatpush.bf16.msra.mxu0 0
        %781 = vmatpush.bf16.msra.mxu0 0
        %782 = vmatpush.bf16.msra.mxu0 0
        %783 = vmatpush.bf16.msra.mxu0 0
        %784 = vmatpush.bf16.msra.mxu0 0
        %785 = vmatpush.bf16.msra.mxu0 0
        %786 = vmatpush.bf16.msra.mxu0 0
        %787 = vmatpush.bf16.msra.mxu0 %v763
        %788 = vmatmul.bf16.gmra.mxu0 %v766
        %v789 = vpop.f32.mrf.mxu0
        %v790 = vadd.f32 0.0, %v789
        %v791 = vpop.f32.mrf.mxu0
        %v792 = vadd.f32 0.0, %v791
        %793 = vmatmul.bf16.gmra.mxu0 %v769
        %v794 = vpop.f32.mrf.mxu0
        %v795 = vadd.f32 0.0, %v794
        %v796 = vpop.f32.mrf.mxu0
        %v797 = vadd.f32 0.0, %v796
        %798 = vmatmul.bf16.gmra.mxu0 %v772
        %v799 = vpop.f32.mrf.mxu0
        %v800 = vadd.f32 0.0, %v799
        %v801 = vpop.f32.mrf.mxu0
        %v802 = vadd.f32 0.0, %v801
        %803 = vmatmul.bf16.gmra.mxu0 %v775
        %v804 = vpop.f32.mrf.mxu0
        %v805 = vadd.f32 0.0, %v804
        %v806 = vpop.f32.mrf.mxu0
        %v807 = vadd.f32 0.0, %v806
        %808 = vmatmul.bf16.gmra.mxu0 %v778
        %v809 = vpop.f32.mrf.mxu0
        %v810 = vadd.f32 0.0, %v809
        %v811 = vpop.f32.mrf.mxu0
        %v812 = vadd.f32 0.0, %v811
        %813 = vdwg.mxu0
        %v814 = vadd.f32 %v730, %v790
        %v815 = vadd.f32 %v731, %v792
        %v816 = vadd.f32 %v732, %v795
        %v817 = vadd.f32 %v733, %v797
        %v818 = vadd.f32 %v734, %v800
        %v819 = vadd.f32 %v735, %v802
        %v820 = vadd.f32 %v736, %v805
        %v821 = vadd.f32 %v737, %v807
        %v822 = vadd.f32 %v738, %v810
        %v823 = vadd.f32 %v739, %v812
        %v824 = vld [vmem:[%s210 + $0x8] sm:$0xc]
        %v825 = vld [vmem:[%s210 + $0xc] sm:$0xf]
        %v826 = vld [vmem:[%s210 + $0x10] sm:$0xf]
        %v827 = vld [vmem:[%s210 + $0x14] sm:$0xf]
        %v828 = vld [vmem:[%s210 + $0x18] sm:$0xf]
        %v829 = vld [vmem:[%s210 + $0x1c] sm:$0xf]
        %v830 = vld [vmem:[%s210 + $0x20] sm:$0xf]
        %v831 = vld [vmem:[%s210 + $0x24] sm:$0xf]
        %v832 = vld [vmem:[%s210 + $0x28] sm:$0xf]
        %v833 = vld [vmem:[%s210 + $0x2c] sm:$0xf]
        %v834 = vld [vmem:[%s210 + $0x30] sm:$0x3]
        %s835 = scalar_lea.vmem %s2, 48
        %v836 = vld [vmem:[%s835] sm:$0xf]
        %v837 = vld [vmem:[%s835 + $0x4] sm:$0xf]
        %v849 = vunpack.c.l.b16 %v824
        %v850 = vunpack.c.l.b16 %v825
        %v851 = vunpack.c.l.b16 %v826
        %v852 = vunpack.c.l.b16 %v827
        %v853 = vunpack.c.l.b16 %v828
        %v854 = vunpack.c.l.b16 %v829
        %v855 = vunpack.c.l.b16 %v830
        %v856 = vunpack.c.l.b16 %v831
        %v857 = vunpack.c.l.b16 %v832
        %v858 = vunpack.c.l.b16 %v833
        %v859 = vunpack.c.l.b16 %v834
        %v860 = vpack.c.b16 %v850, %v849
        %v861 = vpack.c.b16 %v852, %v851
        %v862 = vpack.c.b16 %v854, %v853
        %v863 = vpack.c.b16 %v856, %v855
        %v864 = vpack.c.b16 %v858, %v857
        %v865 = vpack.c.b16 %v859, %v859
        %v866 = vrot.slane %v860, 2
        %v867 = vrot.slane %v861, 2
        %v868 = vsel %vm747, %v866, %v867
        %v869 = vrot.slane %v862, 2
        %v870 = vsel %vm747, %v867, %v869
        %v871 = vrot.slane %v863, 2
        %v872 = vsel %vm747, %v869, %v871
        %v873 = vrot.slane %v864, 2
        %v874 = vsel %vm747, %v871, %v873
        %v875 = vrot.slane %v865, 2
        %v876 = vsel %vm747, %v873, %v875
        %v879 = vunpack.c.l.b16 %v836
        %v880 = vunpack.c.l.b16 %v837
        %v881 = vpack.c.b16 %v880, %v879
        %v884 = vsel %vm312, %v868, 0
        %v887 = vsel %vm312, %v870, 0
        %v890 = vsel %vm312, %v872, 0
        %v893 = vsel %vm312, %v874, 0
        %v896 = vsel %vm312, %v876, 0
        %898 = vmatpush.bf16.msra.mxu0 0
        %899 = vmatpush.bf16.msra.mxu0 0
        %900 = vmatpush.bf16.msra.mxu0 0
        %901 = vmatpush.bf16.msra.mxu0 0
        %902 = vmatpush.bf16.msra.mxu0 0
        %903 = vmatpush.bf16.msra.mxu0 0
        %904 = vmatpush.bf16.msra.mxu0 0
        %905 = vmatpush.bf16.msra.mxu0 %v881
        %906 = vmatmul.bf16.gmra.mxu0 %v884
        %v907 = vpop.f32.mrf.mxu0
        %v908 = vadd.f32 0.0, %v907
        %v909 = vpop.f32.mrf.mxu0
        %v910 = vadd.f32 0.0, %v909
        %911 = vmatmul.bf16.gmra.mxu0 %v887
        %v912 = vpop.f32.mrf.mxu0
        %v913 = vadd.f32 0.0, %v912
        %v914 = vpop.f32.mrf.mxu0
        %v915 = vadd.f32 0.0, %v914
        %916 = vmatmul.bf16.gmra.mxu0 %v890
        %v917 = vpop.f32.mrf.mxu0
        %v918 = vadd.f32 0.0, %v917
        %v919 = vpop.f32.mrf.mxu0
        %v920 = vadd.f32 0.0, %v919
        %921 = vmatmul.bf16.gmra.mxu0 %v893
        %v922 = vpop.f32.mrf.mxu0
        %v923 = vadd.f32 0.0, %v922
        %v924 = vpop.f32.mrf.mxu0
        %v925 = vadd.f32 0.0, %v924
        %926 = vmatmul.bf16.gmra.mxu0 %v896
        %v927 = vpop.f32.mrf.mxu0
        %v928 = vadd.f32 0.0, %v927
        %v929 = vpop.f32.mrf.mxu0
        %v930 = vadd.f32 0.0, %v929
        %931 = vdwg.mxu0
        %v932 = vadd.f32 %v814, %v908
        %v933 = vadd.f32 %v815, %v910
        %v934 = vadd.f32 %v816, %v913
        %v935 = vadd.f32 %v817, %v915
        %v936 = vadd.f32 %v818, %v918
        %v937 = vadd.f32 %v819, %v920
        %v938 = vadd.f32 %v820, %v923
        %v939 = vadd.f32 %v821, %v925
        %v940 = vadd.f32 %v822, %v928
        %v941 = vadd.f32 %v823, %v930
        %v942 = vld [vmem:[%s210 + $0x30] sm:$0x7]
        %s943 = scalar_lea.vmem %s2, 56
        %v944 = vld [vmem:[%s943] sm:$0xf]
        %v945 = vld [vmem:[%s943 + $0x4] sm:$0xf]
        %v947 = vunpack.c.l.b16 %v942
        %v948 = vpack.c.b16 %v947, %v947
        %vm949 = vsmask.f32 5376
        %v951 = vshrl.u32 %v860, 16
        %v953 = vrot.slane %v951, 2
        %v954 = vshll.u32 %v860, 16
        %v956 = vrot.slane %v954, 3
        %v957 = vor.u32 %v953, %v956
        %v959 = vshrl.u32 %v861, 16
        %v961 = vrot.slane %v959, 2
        %v962 = vshll.u32 %v861, 16
        %v964 = vrot.slane %v962, 3
        %v965 = vor.u32 %v961, %v964
        %v966 = vsel %vm949, %v957, %v965
        %v968 = vshrl.u32 %v862, 16
        %v970 = vrot.slane %v968, 2
        %v971 = vshll.u32 %v862, 16
        %v973 = vrot.slane %v971, 3
        %v974 = vor.u32 %v970, %v973
        %v975 = vsel %vm949, %v965, %v974
        %v977 = vshrl.u32 %v863, 16
        %v979 = vrot.slane %v977, 2
        %v980 = vshll.u32 %v863, 16
        %v982 = vrot.slane %v980, 3
        %v983 = vor.u32 %v979, %v982
        %v984 = vsel %vm949, %v974, %v983
        %v986 = vshrl.u32 %v864, 16
        %v988 = vrot.slane %v986, 2
        %v989 = vshll.u32 %v864, 16
        %v991 = vrot.slane %v989, 3
        %v992 = vor.u32 %v988, %v991
        %v993 = vsel %vm949, %v983, %v992
        %v995 = vshrl.u32 %v948, 16
        %v997 = vrot.slane %v995, 2
        %v998 = vshll.u32 %v948, 16
        %v1000 = vrot.slane %v998, 3
        %v1001 = vor.u32 %v997, %v1000
        %v1002 = vsel %vm949, %v992, %v1001
        %v1005 = vunpack.c.l.b16 %v944
        %v1006 = vunpack.c.l.b16 %v945
        %v1007 = vpack.c.b16 %v1006, %v1005
        %v1010 = vsel %vm312, %v966, 0
        %v1013 = vsel %vm312, %v975, 0
        %v1016 = vsel %vm312, %v984, 0
        %v1019 = vsel %vm312, %v993, 0
        %v1022 = vsel %vm312, %v1002, 0
        %1024 = vmatpush.bf16.msra.mxu0 0
        %1025 = vmatpush.bf16.msra.mxu0 0
        %1026 = vmatpush.bf16.msra.mxu0 0
        %1027 = vmatpush.bf16.msra.mxu0 0
        %1028 = vmatpush.bf16.msra.mxu0 0
        %1029 = vmatpush.bf16.msra.mxu0 0
        %1030 = vmatpush.bf16.msra.mxu0 0
        %1031 = vmatpush.bf16.msra.mxu0 %v1007
        %1032 = vmatmul.bf16.gmra.mxu0 %v1010
        %v1033 = vpop.f32.mrf.mxu0
        %v1034 = vadd.f32 0.0, %v1033
        %v1035 = vpop.f32.mrf.mxu0
        %v1036 = vadd.f32 0.0, %v1035
        %1037 = vmatmul.bf16.gmra.mxu0 %v1013
        %v1038 = vpop.f32.mrf.mxu0
        %v1039 = vadd.f32 0.0, %v1038
        %v1040 = vpop.f32.mrf.mxu0
        %v1041 = vadd.f32 0.0, %v1040
        %1042 = vmatmul.bf16.gmra.mxu0 %v1016
        %v1043 = vpop.f32.mrf.mxu0
        %v1044 = vadd.f32 0.0, %v1043
        %v1045 = vpop.f32.mrf.mxu0
        %v1046 = vadd.f32 0.0, %v1045
        %1047 = vmatmul.bf16.gmra.mxu0 %v1019
        %v1048 = vpop.f32.mrf.mxu0
        %v1049 = vadd.f32 0.0, %v1048
        %v1050 = vpop.f32.mrf.mxu0
        %v1051 = vadd.f32 0.0, %v1050
        %1052 = vmatmul.bf16.gmra.mxu0 %v1022
        %v1053 = vpop.f32.mrf.mxu0
        %v1054 = vadd.f32 0.0, %v1053
        %v1055 = vpop.f32.mrf.mxu0
        %v1056 = vadd.f32 0.0, %v1055
        %1057 = vdwg.mxu0
        %v1058 = vadd.f32 %v932, %v1034
        %v1059 = vadd.f32 %v933, %v1036
        %v1060 = vadd.f32 %v934, %v1039
        %v1061 = vadd.f32 %v935, %v1041
        %v1062 = vadd.f32 %v936, %v1044
        %v1063 = vadd.f32 %v937, %v1046
        %v1064 = vadd.f32 %v938, %v1049
        %v1065 = vadd.f32 %v939, %v1051
        %v1066 = vadd.f32 %v940, %v1054
        %v1067 = vadd.f32 %v941, %v1056
        %v1068 = vld [vmem:[%s210 + $0x8] sm:$0x8]
        %s1069 = scalar_lea.vmem %s2, 64
        %v1070 = vld [vmem:[%s1069] sm:$0xf]
        %v1071 = vld [vmem:[%s1069 + $0x4] sm:$0xf]
        %v1073 = vunpack.c.l.b16 %v1068
        %v1074 = vpack.c.b16 %v850, %v1073
        %vm1075 = vcmask 1044480
        %v1076 = vrot.slane %v1074, 3
        %v1077 = vrot.slane %v861, 3
        %v1078 = vsel %vm1075, %v1076, %v1077
        %v1079 = vrot.slane %v862, 3
        %v1080 = vsel %vm1075, %v1077, %v1079
        %v1081 = vrot.slane %v863, 3
        %v1082 = vsel %vm1075, %v1079, %v1081
        %v1083 = vrot.slane %v864, 3
        %v1084 = vsel %vm1075, %v1081, %v1083
        %v1085 = vrot.slane %v948, 3
        %v1086 = vsel %vm1075, %v1083, %v1085
        %v1089 = vunpack.c.l.b16 %v1070
        %v1090 = vunpack.c.l.b16 %v1071
        %v1091 = vpack.c.b16 %v1090, %v1089
        %v1094 = vsel %vm312, %v1078, 0
        %v1097 = vsel %vm312, %v1080, 0
        %v1100 = vsel %vm312, %v1082, 0
        %v1103 = vsel %vm312, %v1084, 0
        %v1106 = vsel %vm312, %v1086, 0
        %1108 = vmatpush.bf16.msra.mxu0 0
        %1109 = vmatpush.bf16.msra.mxu0 0
        %1110 = vmatpush.bf16.msra.mxu0 0
        %1111 = vmatpush.bf16.msra.mxu0 0
        %1112 = vmatpush.bf16.msra.mxu0 0
        %1113 = vmatpush.bf16.msra.mxu0 0
        %1114 = vmatpush.bf16.msra.mxu0 0
        %1115 = vmatpush.bf16.msra.mxu0 %v1091
        %1116 = vmatmul.bf16.gmra.mxu0 %v1094
        %v1117 = vpop.f32.mrf.mxu0
        %v1118 = vadd.f32 0.0, %v1117
        %v1119 = vpop.f32.mrf.mxu0
        %v1120 = vadd.f32 0.0, %v1119
        %1121 = vmatmul.bf16.gmra.mxu0 %v1097
        %v1122 = vpop.f32.mrf.mxu0
        %v1123 = vadd.f32 0.0, %v1122
        %v1124 = vpop.f32.mrf.mxu0
        %v1125 = vadd.f32 0.0, %v1124
        %1126 = vmatmul.bf16.gmra.mxu0 %v1100
        %v1127 = vpop.f32.mrf.mxu0
        %v1128 = vadd.f32 0.0, %v1127
        %v1129 = vpop.f32.mrf.mxu0
        %v1130 = vadd.f32 0.0, %v1129
        %1131 = vmatmul.bf16.gmra.mxu0 %v1103
        %v1132 = vpop.f32.mrf.mxu0
        %v1133 = vadd.f32 0.0, %v1132
        %v1134 = vpop.f32.mrf.mxu0
        %v1135 = vadd.f32 0.0, %v1134
        %1136 = vmatmul.bf16.gmra.mxu0 %v1106
        %v1137 = vpop.f32.mrf.mxu0
        %v1138 = vadd.f32 0.0, %v1137
        %v1139 = vpop.f32.mrf.mxu0
        %v1140 = vadd.f32 0.0, %v1139
        %1141 = vdwg.mxu0
        %v1142 = vadd.f32 %v1058, %v1118
        %v1143 = vadd.f32 %v1059, %v1120
        %v1144 = vadd.f32 %v1060, %v1123
        %v1145 = vadd.f32 %v1061, %v1125
        %v1146 = vadd.f32 %v1062, %v1128
        %v1147 = vadd.f32 %v1063, %v1130
        %v1148 = vadd.f32 %v1064, %v1133
        %v1149 = vadd.f32 %v1065, %v1135
        %v1150 = vadd.f32 %v1066, %v1138
        %v1151 = vadd.f32 %v1067, %v1140
        %v1152 = vld [vmem:[%s215] sm:$0xf]
        %v1153 = vld [vmem:[%s215 + $0x4] sm:$0xf]
        %v1154 = vld [vmem:[%s215 + $0x8] sm:$0xf]
        %v1155 = vld [vmem:[%s215 + $0xc] sm:$0xf]
        %v1156 = vld [vmem:[%s215 + $0x10] sm:$0xf]
        %v1157 = vld [vmem:[%s215 + $0x14] sm:$0xf]
        %v1158 = vld [vmem:[%s215 + $0x18] sm:$0xf]
        %v1159 = vld [vmem:[%s215 + $0x1c] sm:$0xf]
        %v1160 = vld [vmem:[%s215 + $0x20] sm:$0xf]
        %v1161 = vld [vmem:[%s215 + $0x24] sm:$0xf]
        %v1162 = vld [vmem:[%s3] sm:$0xf]
        %v1173 = vunpack.c.l.b16 %v1152
        %v1174 = vunpack.c.l.b16 %v1153
        %v1175 = vunpack.c.l.b16 %v1154
        %v1176 = vunpack.c.l.b16 %v1155
        %v1177 = vunpack.c.l.b16 %v1156
        %v1178 = vunpack.c.l.b16 %v1157
        %v1179 = vunpack.c.l.b16 %v1158
        %v1180 = vunpack.c.l.b16 %v1159
        %v1181 = vunpack.c.l.b16 %v1160
        %v1182 = vunpack.c.l.b16 %v1161
        %v1183 = vpack.c.b16 %v1174, %v1173
        %v1184 = vpack.c.b16 %v1176, %v1175
        %v1185 = vpack.c.b16 %v1178, %v1177
        %v1186 = vpack.c.b16 %v1180, %v1179
        %v1187 = vpack.c.b16 %v1182, %v1181
        %vm1188 = vcmask 64512
        %v1190 = vsel %vm1188, %v1183, 0
        %v1193 = vsel %vm1188, %v1184, 0
        %v1196 = vsel %vm1188, %v1185, 0
        %v1199 = vsel %vm1188, %v1186, 0
        %v1202 = vsel %vm1188, %v1187, 0
        %vm1204 = vcmask 1043456
        %v1206 = vsel %vm1204, %v1162, 0
        %1208 = vmatpush.bf16.msra.mxu0 0
        %1209 = vmatpush.bf16.msra.mxu0 0
        %1210 = vmatpush.bf16.msra.mxu0 0
        %1211 = vmatpush.bf16.msra.mxu0 0
        %1212 = vmatpush.bf16.msra.mxu0 0
        %1213 = vmatpush.bf16.msra.mxu0 0
        %1214 = vmatpush.bf16.msra.mxu0 0
        %1215 = vmatpush.bf16.msra.mxu0 %v1206
        %1216 = vmatmul.bf16.gmra.mxu0 %v1190
        %v1217 = vpop.f32.mrf.mxu0
        %v1218 = vadd.f32 0.0, %v1217
        %v1219 = vpop.f32.mrf.mxu0
        %v1220 = vadd.f32 0.0, %v1219
        %1221 = vmatmul.bf16.gmra.mxu0 %v1193
        %v1222 = vpop.f32.mrf.mxu0
        %v1223 = vadd.f32 0.0, %v1222
        %v1224 = vpop.f32.mrf.mxu0
        %v1225 = vadd.f32 0.0, %v1224
        %1226 = vmatmul.bf16.gmra.mxu0 %v1196
        %v1227 = vpop.f32.mrf.mxu0
        %v1228 = vadd.f32 0.0, %v1227
        %v1229 = vpop.f32.mrf.mxu0
        %v1230 = vadd.f32 0.0, %v1229
        %1231 = vmatmul.bf16.gmra.mxu0 %v1199
        %v1232 = vpop.f32.mrf.mxu0
        %v1233 = vadd.f32 0.0, %v1232
        %v1234 = vpop.f32.mrf.mxu0
        %v1235 = vadd.f32 0.0, %v1234
        %1236 = vmatmul.bf16.gmra.mxu0 %v1202
        %v1237 = vpop.f32.mrf.mxu0
        %v1238 = vadd.f32 0.0, %v1237
        %v1239 = vpop.f32.mrf.mxu0
        %v1240 = vadd.f32 0.0, %v1239
        %1241 = vdwg.mxu0
        %v1242 = vadd.f32 %v1142, %v1218
        %v1243 = vadd.f32 %v1143, %v1220
        %v1244 = vadd.f32 %v1144, %v1223
        %v1245 = vadd.f32 %v1145, %v1225
        %v1246 = vadd.f32 %v1146, %v1228
        %v1247 = vadd.f32 %v1147, %v1230
        %v1248 = vadd.f32 %v1148, %v1233
        %v1249 = vadd.f32 %v1149, %v1235
        %v1250 = vadd.f32 %v1150, %v1238
        %v1251 = vadd.f32 %v1151, %v1240
        %v1252 = vld [vmem:[%s215] sm:$0xf]
        %v1253 = vld [vmem:[%s215 + $0x4] sm:$0xf]
        %v1254 = vld [vmem:[%s215 + $0x8] sm:$0xf]
        %v1255 = vld [vmem:[%s215 + $0xc] sm:$0xf]
        %v1256 = vld [vmem:[%s215 + $0x10] sm:$0xf]
        %v1257 = vld [vmem:[%s215 + $0x14] sm:$0xf]
        %v1258 = vld [vmem:[%s215 + $0x18] sm:$0xf]
        %v1259 = vld [vmem:[%s215 + $0x1c] sm:$0xf]
        %v1260 = vld [vmem:[%s215 + $0x20] sm:$0xf]
        %v1261 = vld [vmem:[%s215 + $0x24] sm:$0xf]
        %v1262 = vld [vmem:[%s215 + $0x28] sm:$0x1]
        %s1263 = scalar_lea.vmem %s3, 4
        %v1264 = vld [vmem:[%s1263] sm:$0xf]
        %v1276 = vunpack.c.l.b16 %v1252
        %v1277 = vunpack.c.l.b16 %v1253
        %v1278 = vunpack.c.l.b16 %v1254
        %v1279 = vunpack.c.l.b16 %v1255
        %v1280 = vunpack.c.l.b16 %v1256
        %v1281 = vunpack.c.l.b16 %v1257
        %v1282 = vunpack.c.l.b16 %v1258
        %v1283 = vunpack.c.l.b16 %v1259
        %v1284 = vunpack.c.l.b16 %v1260
        %v1285 = vunpack.c.l.b16 %v1261
        %v1286 = vunpack.c.l.b16 %v1262
        %v1287 = vpack.c.b16 %v1277, %v1276
        %v1288 = vpack.c.b16 %v1279, %v1278
        %v1289 = vpack.c.b16 %v1281, %v1280
        %v1290 = vpack.c.b16 %v1283, %v1282
        %v1291 = vpack.c.b16 %v1285, %v1284
        %v1292 = vpack.c.b16 %v1286, %v1286
        %v1294 = vshrl.u32 %v1287, 16
        %v1296 = vshll.u32 %v1287, 16
        %v1298 = vrot.slane %v1296, 1
        %v1299 = vor.u32 %v1294, %v1298
        %v1301 = vshll.u32 %v1288, 16
        %v1303 = vrot.slane %v1301, 1
        %v1304 = vsel %vm261, %v1299, %v1303
        %v1305 = vshrl.u32 %v1288, 16
        %v1307 = vor.u32 %v1305, %v1303
        %v1309 = vshll.u32 %v1289, 16
        %v1311 = vrot.slane %v1309, 1
        %v1312 = vsel %vm261, %v1307, %v1311
        %v1313 = vshrl.u32 %v1289, 16
        %v1315 = vor.u32 %v1313, %v1311
        %v1317 = vshll.u32 %v1290, 16
        %v1319 = vrot.slane %v1317, 1
        %v1320 = vsel %vm261, %v1315, %v1319
        %v1321 = vshrl.u32 %v1290, 16
        %v1323 = vor.u32 %v1321, %v1319
        %v1325 = vshll.u32 %v1291, 16
        %v1327 = vrot.slane %v1325, 1
        %v1328 = vsel %vm261, %v1323, %v1327
        %v1329 = vshrl.u32 %v1291, 16
        %v1331 = vor.u32 %v1329, %v1327
        %v1333 = vshll.u32 %v1292, 16
        %v1335 = vrot.slane %v1333, 1
        %v1336 = vsel %vm261, %v1331, %v1335
        %v1338 = vsel %vm1188, %v1304, 0
        %v1341 = vsel %vm1188, %v1312, 0
        %v1344 = vsel %vm1188, %v1320, 0
        %v1347 = vsel %vm1188, %v1328, 0
        %v1350 = vsel %vm1188, %v1336, 0
        %v1353 = vsel %vm1204, %v1264, 0
        %1355 = vmatpush.bf16.msra.mxu0 0
        %1356 = vmatpush.bf16.msra.mxu0 0
        %1357 = vmatpush.bf16.msra.mxu0 0
        %1358 = vmatpush.bf16.msra.mxu0 0
        %1359 = vmatpush.bf16.msra.mxu0 0
        %1360 = vmatpush.bf16.msra.mxu0 0
        %1361 = vmatpush.bf16.msra.mxu0 0
        %1362 = vmatpush.bf16.msra.mxu0 %v1353
        %1363 = vmatmul.bf16.gmra.mxu0 %v1338
        %v1364 = vpop.f32.mrf.mxu0
        %v1365 = vadd.f32 0.0, %v1364
        %v1366 = vpop.f32.mrf.mxu0
        %v1367 = vadd.f32 0.0, %v1366
        %1368 = vmatmul.bf16.gmra.mxu0 %v1341
        %v1369 = vpop.f32.mrf.mxu0
        %v1370 = vadd.f32 0.0, %v1369
        %v1371 = vpop.f32.mrf.mxu0
        %v1372 = vadd.f32 0.0, %v1371
        %1373 = vmatmul.bf16.gmra.mxu0 %v1344
        %v1374 = vpop.f32.mrf.mxu0
        %v1375 = vadd.f32 0.0, %v1374
        %v1376 = vpop.f32.mrf.mxu0
        %v1377 = vadd.f32 0.0, %v1376
        %1378 = vmatmul.bf16.gmra.mxu0 %v1347
        %v1379 = vpop.f32.mrf.mxu0
        %v1380 = vadd.f32 0.0, %v1379
        %v1381 = vpop.f32.mrf.mxu0
        %v1382 = vadd.f32 0.0, %v1381
        %1383 = vmatmul.bf16.gmra.mxu0 %v1350
        %v1384 = vpop.f32.mrf.mxu0
        %v1385 = vadd.f32 0.0, %v1384
        %v1386 = vpop.f32.mrf.mxu0
        %v1387 = vadd.f32 0.0, %v1386
        %1388 = vdwg.mxu0
        %v1389 = vadd.f32 %v1242, %v1365
        %v1390 = vadd.f32 %v1243, %v1367
        %v1391 = vadd.f32 %v1244, %v1370
        %v1392 = vadd.f32 %v1245, %v1372
        %v1393 = vadd.f32 %v1246, %v1375
        %v1394 = vadd.f32 %v1247, %v1377
        %v1395 = vadd.f32 %v1248, %v1380
        %v1396 = vadd.f32 %v1249, %v1382
        %v1397 = vadd.f32 %v1250, %v1385
        %v1398 = vadd.f32 %v1251, %v1387
        %v1399 = vld [vmem:[%s215] sm:$0xe]
        %s1400 = scalar_lea.vmem %s3, 8
        %v1401 = vld [vmem:[%s1400] sm:$0xf]
        %v1403 = vunpack.c.l.b16 %v1399
        %v1404 = vpack.c.b16 %v1277, %v1403
        %v1405 = vrot.slane %v1404, 1
        %v1406 = vrot.slane %v1288, 1
        %v1407 = vsel %vm419, %v1405, %v1406
        %v1408 = vrot.slane %v1289, 1
        %v1409 = vsel %vm419, %v1406, %v1408
        %v1410 = vrot.slane %v1290, 1
        %v1411 = vsel %vm419, %v1408, %v1410
        %v1412 = vrot.slane %v1291, 1
        %v1413 = vsel %vm419, %v1410, %v1412
        %v1414 = vrot.slane %v1292, 1
        %v1415 = vsel %vm419, %v1412, %v1414
        %v1417 = vsel %vm1188, %v1407, 0
        %v1420 = vsel %vm1188, %v1409, 0
        %v1423 = vsel %vm1188, %v1411, 0
        %v1426 = vsel %vm1188, %v1413, 0
        %v1429 = vsel %vm1188, %v1415, 0
        %v1432 = vsel %vm1204, %v1401, 0
        %1434 = vmatpush.bf16.msra.mxu0 0
        %1435 = vmatpush.bf16.msra.mxu0 0
        %1436 = vmatpush.bf16.msra.mxu0 0
        %1437 = vmatpush.bf16.msra.mxu0 0
        %1438 = vmatpush.bf16.msra.mxu0 0
        %1439 = vmatpush.bf16.msra.mxu0 0
        %1440 = vmatpush.bf16.msra.mxu0 0
        %1441 = vmatpush.bf16.msra.mxu0 %v1432
        %1442 = vmatmul.bf16.gmra.mxu0 %v1417
        %v1443 = vpop.f32.mrf.mxu0
        %v1444 = vadd.f32 0.0, %v1443
        %v1445 = vpop.f32.mrf.mxu0
        %v1446 = vadd.f32 0.0, %v1445
        %1447 = vmatmul.bf16.gmra.mxu0 %v1420
        %v1448 = vpop.f32.mrf.mxu0
        %v1449 = vadd.f32 0.0, %v1448
        %v1450 = vpop.f32.mrf.mxu0
        %v1451 = vadd.f32 0.0, %v1450
        %1452 = vmatmul.bf16.gmra.mxu0 %v1423
        %v1453 = vpop.f32.mrf.mxu0
        %v1454 = vadd.f32 0.0, %v1453
        %v1455 = vpop.f32.mrf.mxu0
        %v1456 = vadd.f32 0.0, %v1455
        %1457 = vmatmul.bf16.gmra.mxu0 %v1426
        %v1458 = vpop.f32.mrf.mxu0
        %v1459 = vadd.f32 0.0, %v1458
        %v1460 = vpop.f32.mrf.mxu0
        %v1461 = vadd.f32 0.0, %v1460
        %1462 = vmatmul.bf16.gmra.mxu0 %v1429
        %v1463 = vpop.f32.mrf.mxu0
        %v1464 = vadd.f32 0.0, %v1463
        %v1465 = vpop.f32.mrf.mxu0
        %v1466 = vadd.f32 0.0, %v1465
        %1467 = vdwg.mxu0
        %v1468 = vadd.f32 %v1389, %v1444
        %v1469 = vadd.f32 %v1390, %v1446
        %v1470 = vadd.f32 %v1391, %v1449
        %v1471 = vadd.f32 %v1392, %v1451
        %v1472 = vadd.f32 %v1393, %v1454
        %v1473 = vadd.f32 %v1394, %v1456
        %v1474 = vadd.f32 %v1395, %v1459
        %v1475 = vadd.f32 %v1396, %v1461
        %v1476 = vadd.f32 %v1397, %v1464
        %v1477 = vadd.f32 %v1398, %v1466
        %v1478 = vld [vmem:[%s215 + $0x4] sm:$0xe]
        %v1479 = vld [vmem:[%s215 + $0x8] sm:$0xf]
        %v1480 = vld [vmem:[%s215 + $0xc] sm:$0xf]
        %v1481 = vld [vmem:[%s215 + $0x10] sm:$0xf]
        %v1482 = vld [vmem:[%s215 + $0x14] sm:$0xf]
        %v1483 = vld [vmem:[%s215 + $0x18] sm:$0xf]
        %v1484 = vld [vmem:[%s215 + $0x1c] sm:$0xf]
        %v1485 = vld [vmem:[%s215 + $0x20] sm:$0xf]
        %v1486 = vld [vmem:[%s215 + $0x24] sm:$0xf]
        %v1487 = vld [vmem:[%s215 + $0x28] sm:$0xf]
        %v1488 = vld [vmem:[%s215 + $0x2c] sm:$0x1]
        %s1489 = scalar_lea.vmem %s3, 12
        %v1490 = vld [vmem:[%s1489] sm:$0xf]
        %v1502 = vunpack.c.l.b16 %v1478
        %v1503 = vunpack.c.l.b16 %v1479
        %v1504 = vunpack.c.l.b16 %v1480
        %v1505 = vunpack.c.l.b16 %v1481
        %v1506 = vunpack.c.l.b16 %v1482
        %v1507 = vunpack.c.l.b16 %v1483
        %v1508 = vunpack.c.l.b16 %v1484
        %v1509 = vunpack.c.l.b16 %v1485
        %v1510 = vunpack.c.l.b16 %v1486
        %v1511 = vunpack.c.l.b16 %v1487
        %v1512 = vunpack.c.l.b16 %v1488
        %v1513 = vpack.c.b16 %v1503, %v1502
        %v1514 = vpack.c.b16 %v1505, %v1504
        %v1515 = vpack.c.b16 %v1507, %v1506
        %v1516 = vpack.c.b16 %v1509, %v1508
        %v1517 = vpack.c.b16 %v1511, %v1510
        %v1518 = vpack.c.b16 %v1512, %v1512
        %v1519 = vrot.slane %v1513, 1
        %v1520 = vrot.slane %v1514, 1
        %v1521 = vsel %vm419, %v1519, %v1520
        %v1522 = vrot.slane %v1515, 1
        %v1523 = vsel %vm419, %v1520, %v1522
        %v1524 = vrot.slane %v1516, 1
        %v1525 = vsel %vm419, %v1522, %v1524
        %v1526 = vrot.slane %v1517, 1
        %v1527 = vsel %vm419, %v1524, %v1526
        %v1528 = vrot.slane %v1518, 1
        %v1529 = vsel %vm419, %v1526, %v1528
        %v1531 = vsel %vm1188, %v1521, 0
        %v1534 = vsel %vm1188, %v1523, 0
        %v1537 = vsel %vm1188, %v1525, 0
        %v1540 = vsel %vm1188, %v1527, 0
        %v1543 = vsel %vm1188, %v1529, 0
        %v1546 = vsel %vm1204, %v1490, 0
        %1548 = vmatpush.bf16.msra.mxu0 0
        %1549 = vmatpush.bf16.msra.mxu0 0
        %1550 = vmatpush.bf16.msra.mxu0 0
        %1551 = vmatpush.bf16.msra.mxu0 0
        %1552 = vmatpush.bf16.msra.mxu0 0
        %1553 = vmatpush.bf16.msra.mxu0 0
        %1554 = vmatpush.bf16.msra.mxu0 0
        %1555 = vmatpush.bf16.msra.mxu0 %v1546
        %1556 = vmatmul.bf16.gmra.mxu0 %v1531
        %v1557 = vpop.f32.mrf.mxu0
        %v1558 = vadd.f32 0.0, %v1557
        %v1559 = vpop.f32.mrf.mxu0
        %v1560 = vadd.f32 0.0, %v1559
        %1561 = vmatmul.bf16.gmra.mxu0 %v1534
        %v1562 = vpop.f32.mrf.mxu0
        %v1563 = vadd.f32 0.0, %v1562
        %v1564 = vpop.f32.mrf.mxu0
        %v1565 = vadd.f32 0.0, %v1564
        %1566 = vmatmul.bf16.gmra.mxu0 %v1537
        %v1567 = vpop.f32.mrf.mxu0
        %v1568 = vadd.f32 0.0, %v1567
        %v1569 = vpop.f32.mrf.mxu0
        %v1570 = vadd.f32 0.0, %v1569
        %1571 = vmatmul.bf16.gmra.mxu0 %v1540
        %v1572 = vpop.f32.mrf.mxu0
        %v1573 = vadd.f32 0.0, %v1572
        %v1574 = vpop.f32.mrf.mxu0
        %v1575 = vadd.f32 0.0, %v1574
        %1576 = vmatmul.bf16.gmra.mxu0 %v1543
        %v1577 = vpop.f32.mrf.mxu0
        %v1578 = vadd.f32 0.0, %v1577
        %v1579 = vpop.f32.mrf.mxu0
        %v1580 = vadd.f32 0.0, %v1579
        %1581 = vdwg.mxu0
        %v1582 = vadd.f32 %v1468, %v1558
        %v1583 = vadd.f32 %v1469, %v1560
        %v1584 = vadd.f32 %v1470, %v1563
        %v1585 = vadd.f32 %v1471, %v1565
        %v1586 = vadd.f32 %v1472, %v1568
        %v1587 = vadd.f32 %v1473, %v1570
        %v1588 = vadd.f32 %v1474, %v1573
        %v1589 = vadd.f32 %v1475, %v1575
        %v1590 = vadd.f32 %v1476, %v1578
        %v1591 = vadd.f32 %v1477, %v1580
        %v1592 = vld [vmem:[%s215 + $0x2c] sm:$0x3]
        %s1593 = scalar_lea.vmem %s3, 16
        %v1594 = vld [vmem:[%s1593] sm:$0xf]
        %v1596 = vunpack.c.l.b16 %v1592
        %v1597 = vpack.c.b16 %v1596, %v1596
        %v1599 = vshrl.u32 %v1513, 16
        %v1601 = vrot.slane %v1599, 1
        %v1602 = vshll.u32 %v1513, 16
        %v1604 = vrot.slane %v1602, 2
        %v1605 = vor.u32 %v1601, %v1604
        %v1607 = vshrl.u32 %v1514, 16
        %v1609 = vrot.slane %v1607, 1
        %v1610 = vshll.u32 %v1514, 16
        %v1612 = vrot.slane %v1610, 2
        %v1613 = vor.u32 %v1609, %v1612
        %v1614 = vsel %vm621, %v1605, %v1613
        %v1616 = vshrl.u32 %v1515, 16
        %v1618 = vrot.slane %v1616, 1
        %v1619 = vshll.u32 %v1515, 16
        %v1621 = vrot.slane %v1619, 2
        %v1622 = vor.u32 %v1618, %v1621
        %v1623 = vsel %vm621, %v1613, %v1622
        %v1625 = vshrl.u32 %v1516, 16
        %v1627 = vrot.slane %v1625, 1
        %v1628 = vshll.u32 %v1516, 16
        %v1630 = vrot.slane %v1628, 2
        %v1631 = vor.u32 %v1627, %v1630
        %v1632 = vsel %vm621, %v1622, %v1631
        %v1634 = vshrl.u32 %v1517, 16
        %v1636 = vrot.slane %v1634, 1
        %v1637 = vshll.u32 %v1517, 16
        %v1639 = vrot.slane %v1637, 2
        %v1640 = vor.u32 %v1636, %v1639
        %v1641 = vsel %vm621, %v1631, %v1640
        %v1643 = vshrl.u32 %v1597, 16
        %v1645 = vrot.slane %v1643, 1
        %v1646 = vshll.u32 %v1597, 16
        %v1648 = vrot.slane %v1646, 2
        %v1649 = vor.u32 %v1645, %v1648
        %v1650 = vsel %vm621, %v1640, %v1649
        %v1652 = vsel %vm1188, %v1614, 0
        %v1655 = vsel %vm1188, %v1623, 0
        %v1658 = vsel %vm1188, %v1632, 0
        %v1661 = vsel %vm1188, %v1641, 0
        %v1664 = vsel %vm1188, %v1650, 0
        %v1667 = vsel %vm1204, %v1594, 0
        %1669 = vmatpush.bf16.msra.mxu0 0
        %1670 = vmatpush.bf16.msra.mxu0 0
        %1671 = vmatpush.bf16.msra.mxu0 0
        %1672 = vmatpush.bf16.msra.mxu0 0
        %1673 = vmatpush.bf16.msra.mxu0 0
        %1674 = vmatpush.bf16.msra.mxu0 0
        %1675 = vmatpush.bf16.msra.mxu0 0
        %1676 = vmatpush.bf16.msra.mxu0 %v1667
        %1677 = vmatmul.bf16.gmra.mxu0 %v1652
        %v1678 = vpop.f32.mrf.mxu0
        %v1679 = vadd.f32 0.0, %v1678
        %v1680 = vpop.f32.mrf.mxu0
        %v1681 = vadd.f32 0.0, %v1680
        %1682 = vmatmul.bf16.gmra.mxu0 %v1655
        %v1683 = vpop.f32.mrf.mxu0
        %v1684 = vadd.f32 0.0, %v1683
        %v1685 = vpop.f32.mrf.mxu0
        %v1686 = vadd.f32 0.0, %v1685
        %1687 = vmatmul.bf16.gmra.mxu0 %v1658
        %v1688 = vpop.f32.mrf.mxu0
        %v1689 = vadd.f32 0.0, %v1688
        %v1690 = vpop.f32.mrf.mxu0
        %v1691 = vadd.f32 0.0, %v1690
        %1692 = vmatmul.bf16.gmra.mxu0 %v1661
        %v1693 = vpop.f32.mrf.mxu0
        %v1694 = vadd.f32 0.0, %v1693
        %v1695 = vpop.f32.mrf.mxu0
        %v1696 = vadd.f32 0.0, %v1695
        %1697 = vmatmul.bf16.gmra.mxu0 %v1664
        %v1698 = vpop.f32.mrf.mxu0
        %v1699 = vadd.f32 0.0, %v1698
        %v1700 = vpop.f32.mrf.mxu0
        %v1701 = vadd.f32 0.0, %v1700
        %1702 = vdwg.mxu0
        %v1703 = vadd.f32 %v1582, %v1679
        %v1704 = vadd.f32 %v1583, %v1681
        %v1705 = vadd.f32 %v1584, %v1684
        %v1706 = vadd.f32 %v1585, %v1686
        %v1707 = vadd.f32 %v1586, %v1689
        %v1708 = vadd.f32 %v1587, %v1691
        %v1709 = vadd.f32 %v1588, %v1694
        %v1710 = vadd.f32 %v1589, %v1696
        %v1711 = vadd.f32 %v1590, %v1699
        %v1712 = vadd.f32 %v1591, %v1701
        %v1713 = vld [vmem:[%s215 + $0x4] sm:$0xc]
        %s1714 = scalar_lea.vmem %s3, 20
        %v1715 = vld [vmem:[%s1714] sm:$0xf]
        %v1717 = vunpack.c.l.b16 %v1713
        %v1718 = vpack.c.b16 %v1503, %v1717
        %v1719 = vrot.slane %v1718, 2
        %v1720 = vrot.slane %v1514, 2
        %v1721 = vsel %vm747, %v1719, %v1720
        %v1722 = vrot.slane %v1515, 2
        %v1723 = vsel %vm747, %v1720, %v1722
        %v1724 = vrot.slane %v1516, 2
        %v1725 = vsel %vm747, %v1722, %v1724
        %v1726 = vrot.slane %v1517, 2
        %v1727 = vsel %vm747, %v1724, %v1726
        %v1728 = vrot.slane %v1597, 2
        %v1729 = vsel %vm747, %v1726, %v1728
        %v1731 = vsel %vm1188, %v1721, 0
        %v1734 = vsel %vm1188, %v1723, 0
        %v1737 = vsel %vm1188, %v1725, 0
        %v1740 = vsel %vm1188, %v1727, 0
        %v1743 = vsel %vm1188, %v1729, 0
        %v1746 = vsel %vm1204, %v1715, 0
        %1748 = vmatpush.bf16.msra.mxu0 0
        %1749 = vmatpush.bf16.msra.mxu0 0
        %1750 = vmatpush.bf16.msra.mxu0 0
        %1751 = vmatpush.bf16.msra.mxu0 0
        %1752 = vmatpush.bf16.msra.mxu0 0
        %1753 = vmatpush.bf16.msra.mxu0 0
        %1754 = vmatpush.bf16.msra.mxu0 0
        %1755 = vmatpush.bf16.msra.mxu0 %v1746
        %1756 = vmatmul.bf16.gmra.mxu0 %v1731
        %v1757 = vpop.f32.mrf.mxu0
        %v1758 = vadd.f32 0.0, %v1757
        %v1759 = vpop.f32.mrf.mxu0
        %v1760 = vadd.f32 0.0, %v1759
        %1761 = vmatmul.bf16.gmra.mxu0 %v1734
        %v1762 = vpop.f32.mrf.mxu0
        %v1763 = vadd.f32 0.0, %v1762
        %v1764 = vpop.f32.mrf.mxu0
        %v1765 = vadd.f32 0.0, %v1764
        %1766 = vmatmul.bf16.gmra.mxu0 %v1737
        %v1767 = vpop.f32.mrf.mxu0
        %v1768 = vadd.f32 0.0, %v1767
        %v1769 = vpop.f32.mrf.mxu0
        %v1770 = vadd.f32 0.0, %v1769
        %1771 = vmatmul.bf16.gmra.mxu0 %v1740
        %v1772 = vpop.f32.mrf.mxu0
        %v1773 = vadd.f32 0.0, %v1772
        %v1774 = vpop.f32.mrf.mxu0
        %v1775 = vadd.f32 0.0, %v1774
        %1776 = vmatmul.bf16.gmra.mxu0 %v1743
        %v1777 = vpop.f32.mrf.mxu0
        %v1778 = vadd.f32 0.0, %v1777
        %v1779 = vpop.f32.mrf.mxu0
        %v1780 = vadd.f32 0.0, %v1779
        %1781 = vdwg.mxu0
        %v1782 = vadd.f32 %v1703, %v1758
        %v1783 = vadd.f32 %v1704, %v1760
        %v1784 = vadd.f32 %v1705, %v1763
        %v1785 = vadd.f32 %v1706, %v1765
        %v1786 = vadd.f32 %v1707, %v1768
        %v1787 = vadd.f32 %v1708, %v1770
        %v1788 = vadd.f32 %v1709, %v1773
        %v1789 = vadd.f32 %v1710, %v1775
        %v1790 = vadd.f32 %v1711, %v1778
        %v1791 = vadd.f32 %v1712, %v1780
        %v1792 = vld [vmem:[%s215 + $0x8] sm:$0xc]
        %v1793 = vld [vmem:[%s215 + $0xc] sm:$0xf]
        %v1794 = vld [vmem:[%s215 + $0x10] sm:$0xf]
        %v1795 = vld [vmem:[%s215 + $0x14] sm:$0xf]
        %v1796 = vld [vmem:[%s215 + $0x18] sm:$0xf]
        %v1797 = vld [vmem:[%s215 + $0x1c] sm:$0xf]
        %v1798 = vld [vmem:[%s215 + $0x20] sm:$0xf]
        %v1799 = vld [vmem:[%s215 + $0x24] sm:$0xf]
        %v1800 = vld [vmem:[%s215 + $0x28] sm:$0xf]
        %v1801 = vld [vmem:[%s215 + $0x2c] sm:$0xf]
        %v1802 = vld [vmem:[%s215 + $0x30] sm:$0x3]
        %s1803 = scalar_lea.vmem %s3, 24
        %v1804 = vld [vmem:[%s1803] sm:$0xf]
        %v1816 = vunpack.c.l.b16 %v1792
        %v1817 = vunpack.c.l.b16 %v1793
        %v1818 = vunpack.c.l.b16 %v1794
        %v1819 = vunpack.c.l.b16 %v1795
        %v1820 = vunpack.c.l.b16 %v1796
        %v1821 = vunpack.c.l.b16 %v1797
        %v1822 = vunpack.c.l.b16 %v1798
        %v1823 = vunpack.c.l.b16 %v1799
        %v1824 = vunpack.c.l.b16 %v1800
        %v1825 = vunpack.c.l.b16 %v1801
        %v1826 = vunpack.c.l.b16 %v1802
        %v1827 = vpack.c.b16 %v1817, %v1816
        %v1828 = vpack.c.b16 %v1819, %v1818
        %v1829 = vpack.c.b16 %v1821, %v1820
        %v1830 = vpack.c.b16 %v1823, %v1822
        %v1831 = vpack.c.b16 %v1825, %v1824
        %v1832 = vpack.c.b16 %v1826, %v1826
        %v1833 = vrot.slane %v1827, 2
        %v1834 = vrot.slane %v1828, 2
        %v1835 = vsel %vm747, %v1833, %v1834
        %v1836 = vrot.slane %v1829, 2
        %v1837 = vsel %vm747, %v1834, %v1836
        %v1838 = vrot.slane %v1830, 2
        %v1839 = vsel %vm747, %v1836, %v1838
        %v1840 = vrot.slane %v1831, 2
        %v1841 = vsel %vm747, %v1838, %v1840
        %v1842 = vrot.slane %v1832, 2
        %v1843 = vsel %vm747, %v1840, %v1842
        %v1845 = vsel %vm1188, %v1835, 0
        %v1848 = vsel %vm1188, %v1837, 0
        %v1851 = vsel %vm1188, %v1839, 0
        %v1854 = vsel %vm1188, %v1841, 0
        %v1857 = vsel %vm1188, %v1843, 0
        %v1860 = vsel %vm1204, %v1804, 0
        %1862 = vmatpush.bf16.msra.mxu0 0
        %1863 = vmatpush.bf16.msra.mxu0 0
        %1864 = vmatpush.bf16.msra.mxu0 0
        %1865 = vmatpush.bf16.msra.mxu0 0
        %1866 = vmatpush.bf16.msra.mxu0 0
        %1867 = vmatpush.bf16.msra.mxu0 0
        %1868 = vmatpush.bf16.msra.mxu0 0
        %1869 = vmatpush.bf16.msra.mxu0 %v1860
        %1870 = vmatmul.bf16.gmra.mxu0 %v1845
        %v1871 = vpop.f32.mrf.mxu0
        %v1872 = vadd.f32 0.0, %v1871
        %v1873 = vpop.f32.mrf.mxu0
        %v1874 = vadd.f32 0.0, %v1873
        %1875 = vmatmul.bf16.gmra.mxu0 %v1848
        %v1876 = vpop.f32.mrf.mxu0
        %v1877 = vadd.f32 0.0, %v1876
        %v1878 = vpop.f32.mrf.mxu0
        %v1879 = vadd.f32 0.0, %v1878
        %1880 = vmatmul.bf16.gmra.mxu0 %v1851
        %v1881 = vpop.f32.mrf.mxu0
        %v1882 = vadd.f32 0.0, %v1881
        %v1883 = vpop.f32.mrf.mxu0
        %v1884 = vadd.f32 0.0, %v1883
        %1885 = vmatmul.bf16.gmra.mxu0 %v1854
        %v1886 = vpop.f32.mrf.mxu0
        %v1887 = vadd.f32 0.0, %v1886
        %v1888 = vpop.f32.mrf.mxu0
        %v1889 = vadd.f32 0.0, %v1888
        %1890 = vmatmul.bf16.gmra.mxu0 %v1857
        %v1891 = vpop.f32.mrf.mxu0
        %v1892 = vadd.f32 0.0, %v1891
        %v1893 = vpop.f32.mrf.mxu0
        %v1894 = vadd.f32 0.0, %v1893
        %1895 = vdwg.mxu0
        %v1896 = vadd.f32 %v1782, %v1872
        %v1897 = vadd.f32 %v1783, %v1874
        %v1898 = vadd.f32 %v1784, %v1877
        %v1899 = vadd.f32 %v1785, %v1879
        %v1900 = vadd.f32 %v1786, %v1882
        %v1901 = vadd.f32 %v1787, %v1884
        %v1902 = vadd.f32 %v1788, %v1887
        %v1903 = vadd.f32 %v1789, %v1889
        %v1904 = vadd.f32 %v1790, %v1892
        %v1905 = vadd.f32 %v1791, %v1894
        %v1906 = vld [vmem:[%s215 + $0x30] sm:$0x7]
        %s1907 = scalar_lea.vmem %s3, 28
        %v1908 = vld [vmem:[%s1907] sm:$0xf]
        %v1910 = vunpack.c.l.b16 %v1906
        %v1911 = vpack.c.b16 %v1910, %v1910
        %v1913 = vshrl.u32 %v1827, 16
        %v1915 = vrot.slane %v1913, 2
        %v1916 = vshll.u32 %v1827, 16
        %v1918 = vrot.slane %v1916, 3
        %v1919 = vor.u32 %v1915, %v1918
        %v1921 = vshrl.u32 %v1828, 16
        %v1923 = vrot.slane %v1921, 2
        %v1924 = vshll.u32 %v1828, 16
        %v1926 = vrot.slane %v1924, 3
        %v1927 = vor.u32 %v1923, %v1926
        %v1928 = vsel %vm949, %v1919, %v1927
        %v1930 = vshrl.u32 %v1829, 16
        %v1932 = vrot.slane %v1930, 2
        %v1933 = vshll.u32 %v1829, 16
        %v1935 = vrot.slane %v1933, 3
        %v1936 = vor.u32 %v1932, %v1935
        %v1937 = vsel %vm949, %v1927, %v1936
        %v1939 = vshrl.u32 %v1830, 16
        %v1941 = vrot.slane %v1939, 2
        %v1942 = vshll.u32 %v1830, 16
        %v1944 = vrot.slane %v1942, 3
        %v1945 = vor.u32 %v1941, %v1944
        %v1946 = vsel %vm949, %v1936, %v1945
        %v1948 = vshrl.u32 %v1831, 16
        %v1950 = vrot.slane %v1948, 2
        %v1951 = vshll.u32 %v1831, 16
        %v1953 = vrot.slane %v1951, 3
        %v1954 = vor.u32 %v1950, %v1953
        %v1955 = vsel %vm949, %v1945, %v1954
        %v1957 = vshrl.u32 %v1911, 16
        %v1959 = vrot.slane %v1957, 2
        %v1960 = vshll.u32 %v1911, 16
        %v1962 = vrot.slane %v1960, 3
        %v1963 = vor.u32 %v1959, %v1962
        %v1964 = vsel %vm949, %v1954, %v1963
        %v1966 = vsel %vm1188, %v1928, 0
        %v1969 = vsel %vm1188, %v1937, 0
        %v1972 = vsel %vm1188, %v1946, 0
        %v1975 = vsel %vm1188, %v1955, 0
        %v1978 = vsel %vm1188, %v1964, 0
        %v1981 = vsel %vm1204, %v1908, 0
        %1983 = vmatpush.bf16.msra.mxu0 0
        %1984 = vmatpush.bf16.msra.mxu0 0
        %1985 = vmatpush.bf16.msra.mxu0 0
        %1986 = vmatpush.bf16.msra.mxu0 0
        %1987 = vmatpush.bf16.msra.mxu0 0
        %1988 = vmatpush.bf16.msra.mxu0 0
        %1989 = vmatpush.bf16.msra.mxu0 0
        %1990 = vmatpush.bf16.msra.mxu0 %v1981
        %1991 = vmatmul.bf16.gmra.mxu0 %v1966
        %v1992 = vpop.f32.mrf.mxu0
        %v1993 = vadd.f32 0.0, %v1992
        %v1994 = vpop.f32.mrf.mxu0
        %v1995 = vadd.f32 0.0, %v1994
        %1996 = vmatmul.bf16.gmra.mxu0 %v1969
        %v1997 = vpop.f32.mrf.mxu0
        %v1998 = vadd.f32 0.0, %v1997
        %v1999 = vpop.f32.mrf.mxu0
        %v2000 = vadd.f32 0.0, %v1999
        %2001 = vmatmul.bf16.gmra.mxu0 %v1972
        %v2002 = vpop.f32.mrf.mxu0
        %v2003 = vadd.f32 0.0, %v2002
        %v2004 = vpop.f32.mrf.mxu0
        %v2005 = vadd.f32 0.0, %v2004
        %2006 = vmatmul.bf16.gmra.mxu0 %v1975
        %v2007 = vpop.f32.mrf.mxu0
        %v2008 = vadd.f32 0.0, %v2007
        %v2009 = vpop.f32.mrf.mxu0
        %v2010 = vadd.f32 0.0, %v2009
        %2011 = vmatmul.bf16.gmra.mxu0 %v1978
        %v2012 = vpop.f32.mrf.mxu0
        %v2013 = vadd.f32 0.0, %v2012
        %v2014 = vpop.f32.mrf.mxu0
        %v2015 = vadd.f32 0.0, %v2014
        %2016 = vdwg.mxu0
        %v2017 = vadd.f32 %v1896, %v1993
        %v2018 = vadd.f32 %v1897, %v1995
        %v2019 = vadd.f32 %v1898, %v1998
        %v2020 = vadd.f32 %v1899, %v2000
        %v2021 = vadd.f32 %v1900, %v2003
        %v2022 = vadd.f32 %v1901, %v2005
        %v2023 = vadd.f32 %v1902, %v2008
        %v2024 = vadd.f32 %v1903, %v2010
        %v2025 = vadd.f32 %v1904, %v2013
        %v2026 = vadd.f32 %v1905, %v2015
        %v2027 = vld [vmem:[%s215 + $0x8] sm:$0x8]
        %s2028 = scalar_lea.vmem %s3, 32
        %v2029 = vld [vmem:[%s2028] sm:$0xf]
        %v2031 = vunpack.c.l.b16 %v2027
        %v2032 = vpack.c.b16 %v1817, %v2031
        %v2033 = vrot.slane %v2032, 3
        %v2034 = vrot.slane %v1828, 3
        %v2035 = vsel %vm1075, %v2033, %v2034
        %v2036 = vrot.slane %v1829, 3
        %v2037 = vsel %vm1075, %v2034, %v2036
        %v2038 = vrot.slane %v1830, 3
        %v2039 = vsel %vm1075, %v2036, %v2038
        %v2040 = vrot.slane %v1831, 3
        %v2041 = vsel %vm1075, %v2038, %v2040
        %v2042 = vrot.slane %v1911, 3
        %v2043 = vsel %vm1075, %v2040, %v2042
        %v2045 = vsel %vm1188, %v2035, 0
        %v2048 = vsel %vm1188, %v2037, 0
        %v2051 = vsel %vm1188, %v2039, 0
        %v2054 = vsel %vm1188, %v2041, 0
        %v2057 = vsel %vm1188, %v2043, 0
        %v2060 = vsel %vm1204, %v2029, 0
        %2062 = vmatpush.bf16.msra.mxu0 0
        %2063 = vmatpush.bf16.msra.mxu0 0
        %2064 = vmatpush.bf16.msra.mxu0 0
        %2065 = vmatpush.bf16.msra.mxu0 0
        %2066 = vmatpush.bf16.msra.mxu0 0
        %2067 = vmatpush.bf16.msra.mxu0 0
        %2068 = vmatpush.bf16.msra.mxu0 0
        %2069 = vmatpush.bf16.msra.mxu0 %v2060
        %2070 = vmatmul.bf16.gmra.mxu0 %v2045
        %v2071 = vpop.f32.mrf.mxu0
        %v2072 = vadd.f32 0.0, %v2071
        %v2073 = vpop.f32.mrf.mxu0
        %v2074 = vadd.f32 0.0, %v2073
        %2075 = vmatmul.bf16.gmra.mxu0 %v2048
        %v2076 = vpop.f32.mrf.mxu0
        %v2077 = vadd.f32 0.0, %v2076
        %v2078 = vpop.f32.mrf.mxu0
        %v2079 = vadd.f32 0.0, %v2078
        %2080 = vmatmul.bf16.gmra.mxu0 %v2051
        %v2081 = vpop.f32.mrf.mxu0
        %v2082 = vadd.f32 0.0, %v2081
        %v2083 = vpop.f32.mrf.mxu0
        %v2084 = vadd.f32 0.0, %v2083
        %2085 = vmatmul.bf16.gmra.mxu0 %v2054
        %v2086 = vpop.f32.mrf.mxu0
        %v2087 = vadd.f32 0.0, %v2086
        %v2088 = vpop.f32.mrf.mxu0
        %v2089 = vadd.f32 0.0, %v2088
        %2090 = vmatmul.bf16.gmra.mxu0 %v2057
        %v2091 = vpop.f32.mrf.mxu0
        %v2092 = vadd.f32 0.0, %v2091
        %v2093 = vpop.f32.mrf.mxu0
        %v2094 = vadd.f32 0.0, %v2093
        %2095 = vdwg.mxu0
        %v2096 = vadd.f32 %v2017, %v2072
        %v2097 = vadd.f32 %v2018, %v2074
        %v2098 = vadd.f32 %v2019, %v2077
        %v2099 = vadd.f32 %v2020, %v2079
        %v2100 = vadd.f32 %v2021, %v2082
        %v2101 = vadd.f32 %v2022, %v2084
        %v2102 = vadd.f32 %v2023, %v2087
        %v2103 = vadd.f32 %v2024, %v2089
        %v2104 = vadd.f32 %v2025, %v2092
        %v2105 = vadd.f32 %v2026, %v2094
        %vm2106 = vcmp.ge.f32.partialorder %v2096, 0.0
        %vm2107 = vcmp.ge.f32.partialorder %v2097, 0.0
        %vm2108 = vcmp.ge.f32.partialorder %v2098, 0.0
        %vm2109 = vcmp.ge.f32.partialorder %v2099, 0.0
        %vm2110 = vcmp.ge.f32.partialorder %v2100, 0.0
        %vm2111 = vcmp.ge.f32.partialorder %v2101, 0.0
        %vm2112 = vcmp.ge.f32.partialorder %v2102, 0.0
        %vm2113 = vcmp.ge.f32.partialorder %v2103, 0.0
        %vm2114 = vcmp.ge.f32.partialorder %v2104, 0.0
        %vm2115 = vcmp.ge.f32.partialorder %v2105, 0.0
        %v2116 = vmul.f32 %v2096, 0.1
        %v2117 = vmul.f32 %v2097, 0.1
        %v2118 = vmul.f32 %v2098, 0.1
        %v2119 = vmul.f32 %v2099, 0.1
        %v2120 = vmul.f32 %v2100, 0.1
        %v2121 = vmul.f32 %v2101, 0.1
        %v2122 = vmul.f32 %v2102, 0.1
        %v2123 = vmul.f32 %v2103, 0.1
        %v2124 = vmul.f32 %v2104, 0.1
        %v2125 = vmul.f32 %v2105, 0.1
        %v2126 = vsel %vm2106, %v2096, %v2116
        %v2127 = vsel %vm2107, %v2097, %v2117
        %v2128 = vsel %vm2108, %v2098, %v2118
        %v2129 = vsel %vm2109, %v2099, %v2119
        %v2130 = vsel %vm2110, %v2100, %v2120
        %v2131 = vsel %vm2111, %v2101, %v2121
        %v2132 = vsel %vm2112, %v2102, %v2122
        %v2133 = vsel %vm2113, %v2103, %v2123
        %v2134 = vsel %vm2114, %v2104, %v2124
        %v2135 = vsel %vm2115, %v2105, %v2125
        %v2146 = vrot.slane %v2126, 2
        %v2147 = vrot.slane %v2126, 4
        %v2148 = vrot.slane %v2126, 6
        %v2149 = vrot.slane %v2127, 2
        %v2150 = vrot.slane %v2127, 4
        %v2151 = vrot.slane %v2127, 6
        %v2152 = vrot.slane %v2128, 4
        %v2153 = vrot.slane %v2128, 6
        %v2154 = vrot.slane %v2129, 2
        %v2155 = vrot.slane %v2129, 6
        %v2156 = vrot.slane %v2130, 2
        %v2157 = vrot.slane %v2130, 4
        %v2158 = vrot.slane %v2131, 2
        %v2159 = vrot.slane %v2131, 4
        %v2160 = vrot.slane %v2131, 6
        %v2161 = vrot.slane %v2132, 2
        %v2162 = vrot.slane %v2132, 4
        %v2163 = vrot.slane %v2132, 6
        %v2164 = vrot.slane %v2133, 4
        %v2165 = vrot.slane %v2133, 6
        %v2166 = vrot.slane %v2134, 2
        %v2167 = vrot.slane %v2134, 6
        %v2168 = vrot.slane %v2135, 2
        %v2169 = vrot.slane %v2135, 4
        %2170 = vst [vmem:[#allocation1] ss:$4 sm:$0xff] %v2126
        %s2171 = scalar_lea.vmem [#allocation1], 1
        %2172 = vst [vmem:[%s2171] ss:$4 sm:$0xff] %v2146
        %s2173 = scalar_lea.vmem [#allocation1], 2
        %2174 = vst [vmem:[%s2173] ss:$4 sm:$0xff] %v2147
        %s2175 = scalar_lea.vmem [#allocation1], 3
        %2176 = vst [vmem:[%s2175] ss:$4 sm:$0xff] %v2148
        %v2177 = vld.sshfl [vmem:[#allocation1] sm:$0xff pattern:$0x73625140]
        %s2178 = scalar_lea.vmem [#allocation1], 32
        %2179 = vst [vmem:[%s2178] ss:$4 sm:$0xff] %v2149
        %s2180 = scalar_lea.vmem [#allocation1], 33
        %2181 = vst [vmem:[%s2180] ss:$4 sm:$0xff] %v2150
        %s2182 = scalar_lea.vmem [#allocation1], 34
        %2183 = vst [vmem:[%s2182] ss:$4 sm:$0xff] %v2151
        %s2184 = scalar_lea.vmem [#allocation1], 35
        %2185 = vst [vmem:[%s2184] ss:$4 sm:$0xff] %v2128
        %v2186 = vld.sshfl [vmem:[#allocation1 + $0x20] sm:$0xff pattern:$0x73625140]
        %2187 = vst [vmem:[#allocation1] ss:$4 sm:$0xff] %v2152
        %2188 = vst [vmem:[%s2171] ss:$4 sm:$0xff] %v2153
        %2189 = vst [vmem:[%s2173] ss:$4 sm:$0xff] %v2129
        %2190 = vst [vmem:[%s2175] ss:$4 sm:$0xff] %v2154
        %v2191 = vld.sshfl [vmem:[#allocation1] sm:$0xff pattern:$0x73625140]
        %2192 = vst [vmem:[%s2178] ss:$4 sm:$0xff] %v2155
        %2193 = vst [vmem:[%s2180] ss:$4 sm:$0xff] %v2130
        %2194 = vst [vmem:[%s2182] ss:$4 sm:$0xff] %v2156
        %2195 = vst [vmem:[%s2184] ss:$4 sm:$0xff] %v2157
        %v2196 = vld.sshfl [vmem:[#allocation1 + $0x20] sm:$0xff pattern:$0x73625140]
        %2197 = vst [vmem:[#allocation1] ss:$4 sm:$0xff] %v2131
        %2198 = vst [vmem:[%s2171] ss:$4 sm:$0xff] %v2158
        %2199 = vst [vmem:[%s2173] ss:$4 sm:$0xff] %v2159
        %2200 = vst [vmem:[%s2175] ss:$4 sm:$0xff] %v2160
        %v2201 = vld.sshfl [vmem:[#allocation1] sm:$0xff pattern:$0x73625140]
        %2202 = vst [vmem:[%s2178] ss:$4 sm:$0xff] %v2161
        %2203 = vst [vmem:[%s2180] ss:$4 sm:$0xff] %v2162
        %2204 = vst [vmem:[%s2182] ss:$4 sm:$0xff] %v2163
        %2205 = vst [vmem:[%s2184] ss:$4 sm:$0xff] %v2133
        %v2206 = vld.sshfl [vmem:[#allocation1 + $0x20] sm:$0xff pattern:$0x73625140]
        %2207 = vst [vmem:[#allocation1] ss:$4 sm:$0xff] %v2164
        %2208 = vst [vmem:[%s2171] ss:$4 sm:$0xff] %v2165
        %2209 = vst [vmem:[%s2173] ss:$4 sm:$0xff] %v2134
        %2210 = vst [vmem:[%s2175] ss:$4 sm:$0xff] %v2166
        %v2211 = vld.sshfl [vmem:[#allocation1] sm:$0xff pattern:$0x73625140]
        %2212 = vst [vmem:[%s2178] ss:$4 sm:$0xff] %v2167
        %2213 = vst [vmem:[%s2180] ss:$4 sm:$0xff] %v2135
        %2214 = vst [vmem:[%s2182] ss:$4 sm:$0xff] %v2168
        %2215 = vst [vmem:[%s2184] ss:$4 sm:$0xff] %v2169
        %v2216 = vld.sshfl [vmem:[#allocation1 + $0x20] sm:$0xff pattern:$0x73625140]
        %v2225 = vpack.c.bf16 %v2177, %v2177
        %v2226 = vpack.c.bf16 %v2186, %v2186
        %v2227 = vpack.c.bf16 %v2191, %v2191
        %v2228 = vpack.c.bf16 %v2196, %v2196
        %v2229 = vpack.c.bf16 %v2201, %v2201
        %v2230 = vpack.c.bf16 %v2206, %v2206
        %v2231 = vpack.c.bf16 %v2211, %v2211
        %v2232 = vpack.c.bf16 %v2216, %v2216
        %vm2233 = vcmask 388096
        %2234 = vst.msk [vmem:[%s205] sm:$0xf] %vm2233, %v2225
        %2235 = vst.msk [vmem:[%s205 + $0x4] sm:$0xf] %vm2233, %v2226
        %2236 = vst.msk [vmem:[%s205 + $0x8] sm:$0xf] %vm2233, %v2227
        %2237 = vst.msk [vmem:[%s205 + $0xc] sm:$0xf] %vm2233, %v2228
        %2238 = vst.msk [vmem:[%s205 + $0x10] sm:$0xf] %vm2233, %v2229
        %2239 = vst.msk [vmem:[%s205 + $0x14] sm:$0xf] %vm2233, %v2230
        %2240 = vst.msk [vmem:[%s205 + $0x18] sm:$0xf] %vm2233, %v2231
        %2241 = vst.msk [vmem:[%s205 + $0x1c] sm:$0xf] %vm2233, %v2232
        %s2242 = sand.u32 %s120, 1
        %s2243 = scalar_lea.sflag [#allocation3], %s2242
        %s2244 = sand.u32 %s120, 1
        %s2245 = smul.addr %s2244, 32
        %s2246 = scalar_lea.vmem [#allocation2], %s2245
        // Predicated region
        $region37: #{tpu_custom_call.1} parent=35 // pred_check
          %p2247 = pneg %p130
        $region38: #{tpu_custom_call.1} parent=35 // pred_check_branch
          %2249 = sbr.rel (%p2247) target = $region40
        $region39: #{tpu_custom_call.1} parent=35 // pred_region
          %2251 = vsyncadd %s2243, 0
          %s2252 = smul.addr %s18, 8
          %s2253 = smul.addr %s2252, 4
          %s2254 = scalar_lea.hbm %s4, %s2253
          %s2255 = sshll.u32 %s2246, 4
          %s2256 = int_to_ptr.vmem [resolvable:$true] %s2255
          %s2257 = sshll.u32 %s2254, 4
          %s2258 = int_to_ptr.hbm [resolvable:$true] %s2257
          %2263 = dma.vmem_to_hbm [thread:$0]  %s2256, 512, %s2258, %s2243, 64, 64, 4
        $region40: #{tpu_custom_call.1} parent=35 // pred_fallthru
          _
      $region36: #{tpu_custom_call.1} parent=5 // pred_fallthru
        _
      %p2264 = scmp.le.s32.totalorder 2, %s13
      // Predicated region
      $region41: #{tpu_custom_call.1} parent=5 // pred_check
        %p2265 = pneg %p2264
      $region42: #{tpu_custom_call.1} parent=5 // pred_check_branch
        %2267 = sbr.rel (%p2265) target = $region44
      $region43: #{tpu_custom_call.1} parent=5 // pred_region
        %s2268 = ssub.s32 %s13, 2
        // Predicated region
        $region45: #{tpu_custom_call.1} parent=43 // pred_check
          %p2269 = pneg %p136
        $region46: #{tpu_custom_call.1} parent=43 // pred_check_branch
          %2271 = sbr.rel (%p2269) target = $region48
        $region47: #{tpu_custom_call.1} parent=43 // pred_region
          %s2272 = sand.u32 %s121, 1
          %s2273 = scalar_lea.sflag [#allocation3], %s2272
          %s2274 = sand.u32 %s121, 1
          %s2275 = smul.addr %s2274, 32
          %s2276 = scalar_lea.vmem [#allocation2], %s2275
          %2278 = dma.done %s2273, 512
        $region48: #{tpu_custom_call.1} parent=43 // pred_fallthru
          _
      $region44: #{tpu_custom_call.1} parent=5 // pred_fallthru
        _
    $region6: #{tpu_custom_call.1} parent=1 // loop_footer
      %s17 = sadd.s32 1, %s13
    $region7: #{tpu_custom_call.1} parent=1 // loop_footer_branch
      %12 = sbr.rel target = $region3
    $region8: #{tpu_custom_call.1} parent=1 // loop_exit
      _
    %2279 = vsyncpa [#allocation3], 1
    %s2280 = scalar_lea.sflag [#allocation3], 1
    %2281 = vsyncpa %s2280, 1

</llo_original>
